<compile_context>
chip_gen: v7x
topology: tpu7x:2x2x1
jax: 0.10.0
libtpu: 0.0.40
codegen_flags: <defaults>
</compile_context>

<pallas_src>
import functools

import jax
import jax.numpy as jnp
from jax.experimental import pallas as pl
from jax.experimental.pallas import tpu as pltpu


# ----------------------------------------------------------------------------
# Pass 1: fused depthwise+pointwise conv as a single im2col matmul (K = 9*Cin),
# plus per-tile partial sum / sum-of-squares for the BatchNorm reduction.
# ----------------------------------------------------------------------------
def _conv_kernel(xm_ref, xt_ref, xb_ref, wf_ref, pwb_ref,
                 y_ref, ssum_ref, ssq_ref, *, th, w, cin, cout):
    i = pl.program_id(1)
    n_h = pl.num_programs(1)

    xm = xm_ref[0]                                   # (th, w, cin) bf16
    top = xt_ref[0, 0]                               # (w, cin) = image row i*th - 1
    bot = xb_ref[0, 0]                               # (w, cin) = image row i*th + th
    top = jnp.where(i == 0, jnp.zeros_like(top), top)         # zero pad at image top
    bot = jnp.where(i == n_h - 1, jnp.zeros_like(bot), bot)   # zero pad at image bottom

    # Vertically shifted row variants (1-pixel halo; no padded-image scratch).
    x_up = jnp.concatenate([top[None], xm[:-1]], axis=0)   # row y holds input row y-1
    x_dn = jnp.concatenate([xm[1:], bot[None]], axis=0)    # row y holds input row y+1

    zcol = jnp.zeros((th, 1, cin), xm.dtype)

    def shift_l(a):  # col x holds input col x-1  (kw = 0)
        return jnp.concatenate([zcol, a[:, :w - 1, :]], axis=1)

    def shift_r(a):  # col x holds input col x+1  (kw = 2)
        return jnp.concatenate([a[:, 1:, :], zcol], axis=1)

    # im2col operand (th*w, 9*cin): tap order (kh, kw, ci) matches wf_ref's rows.
    taps = []
    for rowv in (x_up, xm, x_dn):                     # kh = 0, 1, 2
        taps += [shift_l(rowv), rowv, shift_r(rowv)]  # kw = 0, 1, 2
    col = jnp.concatenate(taps, axis=-1).reshape(th * w, 9 * cin)

    # Single bf16 MXU matmul with f32 accumulation.
    acc = jnp.dot(col, wf_ref[...], preferred_element_type=jnp.float32)
    acc = acc + pwb_ref[...]                          # (r, cout) + (1, cout)

    # Per-tile partial statistics (f32) for the two-phase BatchNorm.
    ssum_ref[0, 0] = jnp.sum(acc, axis=0, keepdims=True)
    ssq_ref[0, 0] = jnp.sum(acc * acc, axis=0, keepdims=True)

    # Lane-dense store, NO transpose in the MXU pass: (th*w, Cout) slab of (N, H*W, Cout).
    y_ref[0] = acc.astype(y_ref.dtype)


# ----------------------------------------------------------------------------
# Pass 2 (HBM-bound): BatchNorm scale/shift, optional Swish, and the
# (H*W, Cout) -> (Cout, H*W) relayout (transpose lives here, not in pass 1).
# ----------------------------------------------------------------------------
def _bn_act_kernel(y_ref, scale_ref, shift_ref, o_ref, *, activation):
    z = y_ref[0].astype(jnp.float32) * scale_ref[0] + shift_ref[0]   # (th*w, cout)
    if activation:
        z = z + jax.nn.sigmoid(z)                     # Swish(x) = x + sigmoid(x)
    o_ref[0] = z.T                                    # (cout, th*w) lane-dense write


# ----------------------------------------------------------------------------
# Padding-aware VMEM accounting and row-tile selection.
# ----------------------------------------------------------------------------
def _round_up(x, m):
    return -(-x // m) * m


def _phys_bytes(shape, dtype):
    """Physical VMEM footprint of one buffer, including lane/sublane padding."""
    itemsize = jnp.dtype(dtype).itemsize
    if len(shape) < 2:
        n = int(shape[0]) if shape else 1
        return _round_up(max(n, 1) * itemsize, 512)
    sub_pack = 8 * (4 // itemsize)                    # 8 sublanes f32, 16 bf16
    lane = _round_up(int(shape[-1]), 128)
    sub = _round_up(int(shape[-2]), sub_pack)
    lead = 1
    for d in shape[:-2]:
        lead *= int(d)
    return lead * sub * lane * itemsize


def _pass1_step_bytes(th, w, cin, cout):
    r = th * w
    b = 0
    b += 2 * _phys_bytes((th, w, cin), jnp.bfloat16)      # main input tile (x2 buffers)
    b += 4 * _phys_bytes((1, w, cin), jnp.bfloat16)       # 2 halo rows (x2 buffers)
    b += 2 * _phys_bytes((9 * cin, cout), jnp.bfloat16)   # fused weight
    b += 2 * _phys_bytes((1, cout), jnp.float32)          # pointwise bias
    b += 2 * _phys_bytes((r, cout), jnp.bfloat16)         # y tile (x2 buffers)
    b += 4 * _phys_bytes((1, cout), jnp.float32)          # ssum / ssq tiles
    # in-kernel temporaries: 9 shifted taps, im2col operand, f32 accumulator (+headroom)
    b += 9 * _phys_bytes((th, w, cin), jnp.bfloat16)
    b += _phys_bytes((r, 9 * cin), jnp.bfloat16)
    b += 2 * _phys_bytes((r, cout), jnp.float32)
    return b


def _pick_block_h(h, w, cin, cout, budget_bytes):
    """Largest th with h % th == 0, th*w a multiple of 128 (or th == h), and a
    padding-aware per-step VMEM estimate within budget."""
    cands = [t for t in range(1, h) if h % t == 0 and (t * w) % 128 == 0]
    cands.append(h)                                   # full height is always legal
    best = None
    for t in cands:                                   # ascending; keep the largest fit
        if _pass1_step_bytes(t, w, cin, cout) <= budget_bytes:
            best = t
    # TODO(synk): if even the smallest legal row tile exceeds the budget, W should be
    #             tiled too instead of just taking the smallest row tile.
    return cands[0] if best is None else best


# ----------------------------------------------------------------------------
# Wrapper.
# ----------------------------------------------------------------------------
def separable_conv2d(x_nchw, dw_weight, pw_weight, pw_bias, gamma, beta,
                     *, normalize=True, activation=False, eps=1e-3, block_h=None):
    """x_nchw: (N,Cin,H,W); dw_weight: (Cin,1,3,3); pw_weight: (Cout,Cin,1,1);
    pw_bias/gamma/beta: (Cout,).  Returns (N,Cout,H,W) float32."""
    n, cin, h, w = x_nchw.shape
    cout = pw_weight.shape[0]

    # Generation-aware budgets: 128 MiB VMEM on v5e/v6e, 64 MiB per TC on v7x.
    try:
        vmem_cap = int(pltpu.get_tpu_info().vmem_capacity_bytes)
    except Exception:
        vmem_cap = 64 * 1024 * 1024
    budget = max(6 * 1024 * 1024, vmem_cap // 4)
    vmem_limit = min(int(vmem_cap * 0.85), 110 * 1024 * 1024)

    th = int(_pick_block_h(h, w, cin, cout, budget) if block_h is None else block_h)
    assert h % th == 0, "block_h must divide H"
    assert th == h or (th * w) % 128 == 0, "row tile must give a 128-multiple lane dim"
    n_h = h // th

    # Channels-last bf16 input (bf16 MXU operands, f32 accumulation).
    # TODO(synk): the NCHW->NHWC relayout is still one XLA HBM pass, and for Cin << 128
    #             the input tiles stay lane-sparse; a spatial-on-lanes layout would fix both.
    x_int = jnp.transpose(x_nchw, (0, 2, 3, 1)).astype(jnp.bfloat16)    # (N,H,W,Cin)

    # Fused depthwise+pointwise weight as one (9*Cin, Cout) bf16 matrix:
    #   wf2[(kh*3+kw)*Cin + ci, co] = dw[ci, kh, kw] * pw[co, ci]
    dw = dw_weight[:, 0, :, :].astype(jnp.float32)                      # (Cin,3,3)
    pw = pw_weight[:, :, 0, 0].astype(jnp.float32)                      # (Cout,Cin)
    wf = (jnp.transpose(dw, (1, 2, 0))[:, :, :, None] *
          jnp.transpose(pw, (1, 0))[None, None, :, :])                  # (3,3,Cin,Cout)
    wf2 = wf.reshape(9 * cin, cout).astype(jnp.bfloat16)
    pwb = pw_bias.reshape(1, cout).astype(jnp.float32)

    cparams = pltpu.CompilerParams(
        dimension_semantics=("parallel", "parallel"),
        vmem_limit_bytes=vmem_limit)

    # bf16 intermediate when BatchNorm re-normalizes anyway; f32 otherwise.
    y_dtype = jnp.bfloat16 if normalize else jnp.float32

    y_flat, ssum, ssq = pl.pallas_call(
        functools.partial(_conv_kernel, th=th, w=w, cin=cin, cout=cout),
        out_shape=(
            jax.ShapeDtypeStruct((n, h * w, cout), y_dtype),
            jax.ShapeDtypeStruct((n, n_h, 1, cout), jnp.float32),
            jax.ShapeDtypeStruct((n, n_h, 1, cout), jnp.float32),
        ),
        grid_spec=pltpu.PrefetchScalarGridSpec(
            num_scalar_prefetch=0,
            grid=(n, n_h),
            in_specs=[
                # main row tile
                pl.BlockSpec((1, th, w, cin), lambda b, i: (b, i, 0, 0)),
                # 1-row halo above / below (clamped at the border, zeroed in-kernel)
                pl.BlockSpec((1, 1, w, cin),
                             lambda b, i: (b, jnp.maximum(i * th - 1, 0), 0, 0)),
                pl.BlockSpec((1, 1, w, cin),
                             lambda b, i: (b, jnp.minimum(i * th + th, h - 1), 0, 0)),
                # fused im2col weight + pointwise bias (resident across the grid)
                pl.BlockSpec((9 * cin, cout), lambda b, i: (0, 0)),
                pl.BlockSpec((1, cout), lambda b, i: (0, 0)),
            ],
            out_specs=[
                pl.BlockSpec((1, th * w, cout), lambda b, i: (b, i, 0)),
                pl.BlockSpec((1, 1, 1, cout), lambda b, i: (b, i, 0, 0)),
                pl.BlockSpec((1, 1, 1, cout), lambda b, i: (b, i, 0, 0)),
            ],
        ),
        compiler_params=cparams,
    )(x_int, x_int, x_int, wf2, pwb)

    # Tiny cross-tile reduction: training-mode BatchNorm batch statistics.
    if normalize:
        cnt = jnp.float32(n * h * w)
        mean = jnp.sum(ssum, axis=(0, 1, 2)) / cnt
        var = jnp.maximum(jnp.sum(ssq, axis=(0, 1, 2)) / cnt - mean * mean, 0.0)
        inv = jax.lax.rsqrt(var + eps)
        scale = gamma.astype(jnp.float32) * inv
        shift = beta.astype(jnp.float32) - mean * scale
    else:
        scale = jnp.ones((cout,), jnp.float32)
        shift = jnp.zeros((cout,), jnp.float32)

    # Pass 2: scale/shift (+ Swish) and relayout to channel-major, HBM-bound.
    out_flat = pl.pallas_call(
        functools.partial(_bn_act_kernel, activation=activation),
        out_shape=jax.ShapeDtypeStruct((n, cout, h * w), jnp.float32),
        grid_spec=pltpu.PrefetchScalarGridSpec(
            num_scalar_prefetch=0,
            grid=(n, n_h),
            in_specs=[
                pl.BlockSpec((1, th * w, cout), lambda b, i: (b, i, 0)),
                pl.BlockSpec((1, 1, cout), lambda b, i: (0, 0, 0)),
                pl.BlockSpec((1, 1, cout), lambda b, i: (0, 0, 0)),
            ],
            out_specs=pl.BlockSpec((1, cout, th * w), lambda b, i: (b, 0, i)),
        ),
        compiler_params=cparams,
    )(y_flat, scale.reshape(1, 1, cout), shift.reshape(1, 1, cout))

    return out_flat.reshape(n, cout, h, w)             # free view: (N,Cout,H*W) -> NCHW


# ----------------------------------------------------------------------------
# Pure-JAX reference mirroring the PyTorch forward (f32, NCHW).
# ----------------------------------------------------------------------------
def _reference(x, dw_weight, pw_weight, pw_bias, gamma, beta,
               *, normalize=True, activation=False, eps=1e-3):
    cin = x.shape[1]
    y = jax.lax.conv_general_dilated(
        x, dw_weight, window_strides=(1, 1), padding=((1, 1), (1, 1)),
        dimension_numbers=("NCHW", "OIHW", "NCHW"), feature_group_count=cin)
    y = jax.lax.conv_general_dilated(
        y, pw_weight, window_strides=(1, 1), padding="VALID",
        dimension_numbers=("NCHW", "OIHW", "NCHW"))
    y = y + pw_bias[None, :, None, None]
    if normalize:
        mean = jnp.mean(y, axis=(0, 2, 3), keepdims=True)
        var = jnp.mean((y - mean) ** 2, axis=(0, 2, 3), keepdims=True)
        y = (y - mean) * jax.lax.rsqrt(var + eps)
        y = y * gamma[None, :, None, None] + beta[None, :, None, None]
    if activation:
        y = y + jax.nn.sigmoid(y)
    return y


if __name__ == "__main__":
    key = jax.random.PRNGKey(0)
    N, Cin, Cout, H, W = 2, 4, 8, 16, 16

    k0, k1, k2, k3 = jax.random.split(key, 4)
    x = jax.random.normal(k0, (N, Cin, H, W), jnp.float32)
    dw_weight = 0.1 * jax.random.normal(k1, (Cin, 1, 3, 3), jnp.float32)
    pw_weight = 0.1 * jax.random.normal(k2, (Cout, Cin, 1, 1), jnp.float32)
    pw_bias = 0.05 * jax.random.normal(k3, (Cout,), jnp.float32)
    gamma = jnp.ones((Cout,), jnp.float32)     # BatchNorm2d default init
    beta = jnp.zeros((Cout,), jnp.float32)

    # Module defaults (normalize=True, activation=False); block_h=8 forces two
    # row tiles so the halo path is exercised.  bf16 MXU operands -> loose tol.
    out = separable_conv2d(x, dw_weight, pw_weight, pw_bias, gamma, beta,
                           normalize=True, activation=False, block_h=8)
    out = jax.block_until_ready(out)
    ref = _reference(x, dw_weight, pw_weight, pw_bias, gamma, beta,
                     normalize=True, activation=False)
    assert out.shape == (N, Cout, H, W)
    assert jnp.max(jnp.abs(out - ref)) < 6e-2

    # With Swish activation and the auto-chosen (generation-aware) row tile.
    out2 = separable_conv2d(x, dw_weight, pw_weight, pw_bias, gamma, beta,
                            normalize=True, activation=True)
    out2 = jax.block_until_ready(out2)
    ref2 = _reference(x, dw_weight, pw_weight, pw_bias, gamma, beta,
                      normalize=True, activation=True)
    assert jnp.max(jnp.abs(out2 - ref2)) < 6e-2

    print("KERNEL_OK")
</pallas_src>

<mosaic_0001>
module attributes {stable_mosaic.version = 11 : i64} {
  func.func @_conv_kernel(%arg0: i32, %arg1: i32, %arg2: memref<1x8x16x4xbf16, #tpu.memory_space<vmem>>, %arg3: memref<1x1x16x4xbf16, #tpu.memory_space<vmem>>, %arg4: memref<1x1x16x4xbf16, #tpu.memory_space<vmem>>, %arg5: memref<36x8xbf16, #tpu.memory_space<vmem>>, %arg6: memref<1x8xf32, #tpu.memory_space<vmem>>, %arg7: memref<1x128x8xbf16, #tpu.memory_space<vmem>>, %arg8: memref<1x1x1x8xf32, #tpu.memory_space<vmem>>, %arg9: memref<1x1x1x8xf32, #tpu.memory_space<vmem>>) attributes {dimension_semantics = [#tpu.dimension_semantics<parallel>, #tpu.dimension_semantics<parallel>], iteration_bounds = array<i64: 2, 2>, scalar_prefetch = 0 : i64, scratch_operands = 0 : i64, tpu.core_type = #tpu.core_type<tc>, window_params = [{transform_indices = @transform_0, window_bounds = array<i64: 1, 8, 16, 4>}, {transform_indices = @transform_1, window_bounds = array<i64: 1, 1, 16, 4>}, {transform_indices = @transform_2, window_bounds = array<i64: 1, 1, 16, 4>}, {pipeline_mode = #tpu.pipeline_mode<synchronous>, transform_indices = @transform_3, window_bounds = array<i64: 36, 8>}, {pipeline_mode = #tpu.pipeline_mode<synchronous>, transform_indices = @transform_4, window_bounds = array<i64: 1, 8>}, {transform_indices = @transform_5, window_bounds = array<i64: 1, 128, 8>}, {transform_indices = @transform_6, window_bounds = array<i64: 1, 1, 1, 8>}, {transform_indices = @transform_7, window_bounds = array<i64: 1, 1, 1, 8>}]} {
    %c0 = arith.constant 0 : index
    %c0_0 = arith.constant 0 : index
    %c0_1 = arith.constant 0 : index
    %c0_2 = arith.constant 0 : index
    %0 = vector.load %arg2[%c0, %c0_0, %c0_1, %c0_2] : memref<1x8x16x4xbf16, #tpu.memory_space<vmem>>, vector<1x8x16x4xbf16>
    %1 = vector.shape_cast %0 : vector<1x8x16x4xbf16> to vector<8x16x4xbf16>
    %c0_3 = arith.constant 0 : index
    %c0_4 = arith.constant 0 : index
    %c0_5 = arith.constant 0 : index
    %c0_6 = arith.constant 0 : index
    %2 = vector.load %arg3[%c0_3, %c0_4, %c0_5, %c0_6] : memref<1x1x16x4xbf16, #tpu.memory_space<vmem>>, vector<1x1x16x4xbf16>
    %3 = vector.shape_cast %2 : vector<1x1x16x4xbf16> to vector<16x4xbf16>
    %c0_7 = arith.constant 0 : index
    %c0_8 = arith.constant 0 : index
    %c0_9 = arith.constant 0 : index
    %c0_10 = arith.constant 0 : index
    %4 = vector.load %arg4[%c0_7, %c0_8, %c0_9, %c0_10] : memref<1x1x16x4xbf16, #tpu.memory_space<vmem>>, vector<1x1x16x4xbf16>
    %5 = vector.shape_cast %4 : vector<1x1x16x4xbf16> to vector<16x4xbf16>
    %c0_i32 = arith.constant 0 : i32
    %6 = arith.cmpi eq, %arg1, %c0_i32 : i32
    %cst = arith.constant 0.000000e+00 : bf16
    %7 = vector.broadcast %cst : bf16 to vector<16x4xbf16>
    %8 = arith.select %6, %7, %3 : vector<16x4xbf16>
    %c1_i32 = arith.constant 1 : i32
    %9 = arith.cmpi eq, %arg1, %c1_i32 : i32
    %cst_11 = arith.constant 0.000000e+00 : bf16
    %10 = vector.broadcast %cst_11 : bf16 to vector<16x4xbf16>
    %11 = arith.select %9, %10, %5 : vector<16x4xbf16>
    %12 = vector.shape_cast %8 : vector<16x4xbf16> to vector<1x16x4xbf16>
    %13 = vector.extract_strided_slice %1 {offsets = [0, 0, 0], sizes = [7, 16, 4], strides = [1, 1, 1]} : vector<8x16x4xbf16> to vector<7x16x4xbf16>
    %14 = tpu.concatenate %12, %13 in 0 : vector<1x16x4xbf16>, vector<7x16x4xbf16> -> vector<8x16x4xbf16>
    %15 = vector.extract_strided_slice %1 {offsets = [1, 0, 0], sizes = [7, 16, 4], strides = [1, 1, 1]} : vector<8x16x4xbf16> to vector<7x16x4xbf16>
    %16 = vector.shape_cast %11 : vector<16x4xbf16> to vector<1x16x4xbf16>
    %17 = tpu.concatenate %15, %16 in 0 : vector<7x16x4xbf16>, vector<1x16x4xbf16> -> vector<8x16x4xbf16>
    %cst_12 = arith.constant 0.000000e+00 : bf16
    %18 = vector.broadcast %cst_12 : bf16 to vector<8x1x4xbf16>
    %19 = vector.extract_strided_slice %14 {offsets = [0, 0, 0], sizes = [8, 15, 4], strides = [1, 1, 1]} : vector<8x16x4xbf16> to vector<8x15x4xbf16>
    %20 = tpu.concatenate %18, %19 in 1 : vector<8x1x4xbf16>, vector<8x15x4xbf16> -> vector<8x16x4xbf16>
    %21 = vector.extract_strided_slice %14 {offsets = [0, 1, 0], sizes = [8, 15, 4], strides = [1, 1, 1]} : vector<8x16x4xbf16> to vector<8x15x4xbf16>
    %22 = tpu.concatenate %21, %18 in 1 : vector<8x15x4xbf16>, vector<8x1x4xbf16> -> vector<8x16x4xbf16>
    %23 = vector.extract_strided_slice %1 {offsets = [0, 0, 0], sizes = [8, 15, 4], strides = [1, 1, 1]} : vector<8x16x4xbf16> to vector<8x15x4xbf16>
    %24 = tpu.concatenate %18, %23 in 1 : vector<8x1x4xbf16>, vector<8x15x4xbf16> -> vector<8x16x4xbf16>
    %25 = vector.extract_strided_slice %1 {offsets = [0, 1, 0], sizes = [8, 15, 4], strides = [1, 1, 1]} : vector<8x16x4xbf16> to vector<8x15x4xbf16>
    %26 = tpu.concatenate %25, %18 in 1 : vector<8x15x4xbf16>, vector<8x1x4xbf16> -> vector<8x16x4xbf16>
    %27 = vector.extract_strided_slice %17 {offsets = [0, 0, 0], sizes = [8, 15, 4], strides = [1, 1, 1]} : vector<8x16x4xbf16> to vector<8x15x4xbf16>
    %28 = tpu.concatenate %18, %27 in 1 : vector<8x1x4xbf16>, vector<8x15x4xbf16> -> vector<8x16x4xbf16>
    %29 = vector.extract_strided_slice %17 {offsets = [0, 1, 0], sizes = [8, 15, 4], strides = [1, 1, 1]} : vector<8x16x4xbf16> to vector<8x15x4xbf16>
    %30 = tpu.concatenate %29, %18 in 1 : vector<8x15x4xbf16>, vector<8x1x4xbf16> -> vector<8x16x4xbf16>
    %31 = tpu.concatenate %20, %14, %22, %24, %1, %26, %28, %17, %30 in 2 : vector<8x16x4xbf16>, vector<8x16x4xbf16>, vector<8x16x4xbf16>, vector<8x16x4xbf16>, vector<8x16x4xbf16>, vector<8x16x4xbf16>, vector<8x16x4xbf16>, vector<8x16x4xbf16>, vector<8x16x4xbf16> -> vector<8x16x36xbf16>
    %32 = vector.shape_cast %31 : vector<8x16x36xbf16> to vector<128x36xbf16>
    %c0_13 = arith.constant 0 : index
    %c0_14 = arith.constant 0 : index
    %33 = vector.load %arg5[%c0_13, %c0_14] : memref<36x8xbf16, #tpu.memory_space<vmem>>, vector<36x8xbf16>
    %cst_15 = arith.constant dense<0.000000e+00> : vector<128x8xf32>
    %34 = tpu.matmul %32, %33, %cst_15 {dimension_numbers = #tpu.dot_dimension_numbers<[1], [0], [0], [1], [0, 0, 1, 1], [], []>} : vector<128x36xbf16>, vector<36x8xbf16>, vector<128x8xf32> -> vector<128x8xf32>
    %c0_16 = arith.constant 0 : index
    %c0_17 = arith.constant 0 : index
    %35 = vector.load %arg6[%c0_16, %c0_17] : memref<1x8xf32, #tpu.memory_space<vmem>>, vector<1x8xf32>
    %36 = vector.broadcast %35 : vector<1x8xf32> to vector<128x8xf32>
    %37 = arith.addf %34, %36 : vector<128x8xf32>
    %cst_18 = arith.constant dense<0.000000e+00> : vector<8xf32>
    %38 = vector.multi_reduction <add>, %37, %cst_18 [0] : vector<128x8xf32> to vector<8xf32>
    %39 = vector.shape_cast %38 : vector<8xf32> to vector<1x8xf32>
    %c0_19 = arith.constant 0 : index
    %c0_20 = arith.constant 0 : index
    %c0_21 = arith.constant 0 : index
    %c0_22 = arith.constant 0 : index
    %40 = vector.load %arg8[%c0_19, %c0_20, %c0_21, %c0_22] : memref<1x1x1x8xf32, #tpu.memory_space<vmem>>, vector<1x1x1x8xf32>
    %41 = vector.shape_cast %40 : vector<1x1x1x8xf32> to vector<1x8xf32>
    %42 = vector.shape_cast %39 : vector<1x8xf32> to vector<1x1x1x8xf32>
    tpu.vector_store %arg8[%c0_19, %c0_20, %c0_21, %c0_22], %42 {strides = array<i32>} : memref<1x1x1x8xf32, #tpu.memory_space<vmem>>, vector<1x1x1x8xf32>,
    %43 = arith.mulf %37, %37 : vector<128x8xf32>
    %cst_23 = arith.constant dense<0.000000e+00> : vector<8xf32>
    %44 = vector.multi_reduction <add>, %43, %cst_23 [0] : vector<128x8xf32> to vector<8xf32>
    %45 = vector.shape_cast %44 : vector<8xf32> to vector<1x8xf32>
    %c0_24 = arith.constant 0 : index
    %c0_25 = arith.constant 0 : index
    %c0_26 = arith.constant 0 : index
    %c0_27 = arith.constant 0 : index
    %46 = vector.load %arg9[%c0_24, %c0_25, %c0_26, %c0_27] : memref<1x1x1x8xf32, #tpu.memory_space<vmem>>, vector<1x1x1x8xf32>
    %47 = vector.shape_cast %46 : vector<1x1x1x8xf32> to vector<1x8xf32>
    %48 = vector.shape_cast %45 : vector<1x8xf32> to vector<1x1x1x8xf32>
    tpu.vector_store %arg9[%c0_24, %c0_25, %c0_26, %c0_27], %48 {strides = array<i32>} : memref<1x1x1x8xf32, #tpu.memory_space<vmem>>, vector<1x1x1x8xf32>,
    %49 = arith.truncf %37 : vector<128x8xf32> to vector<128x8xbf16>
    %c0_28 = arith.constant 0 : index
    %c0_29 = arith.constant 0 : index
    %c0_30 = arith.constant 0 : index
    %50 = vector.load %arg7[%c0_28, %c0_29, %c0_30] : memref<1x128x8xbf16, #tpu.memory_space<vmem>>, vector<1x128x8xbf16>
    %51 = vector.shape_cast %50 : vector<1x128x8xbf16> to vector<128x8xbf16>
    %52 = vector.shape_cast %49 : vector<128x8xbf16> to vector<1x128x8xbf16>
    tpu.vector_store %arg7[%c0_28, %c0_29, %c0_30], %52 {strides = array<i32>} : memref<1x128x8xbf16, #tpu.memory_space<vmem>>, vector<1x128x8xbf16>,
    return
  }
  func.func @transform_0(%arg0: i32, %arg1: i32) -> (i32, i32, i32, i32) {
    %c0_i32 = arith.constant 0 : i32
    %c0_i32_0 = arith.constant 0 : i32
    %c0_i32_1 = arith.constant 0 : i32
    return %arg0, %arg1, %c0_i32, %c0_i32_0 : i32, i32, i32, i32
  }
  func.func @transform_1(%arg0: i32, %arg1: i32) -> (i32, i32, i32, i32) {
    %c8_i32 = arith.constant 8 : i32
    %0 = arith.muli %arg1, %c8_i32 : i32
    %c1_i32 = arith.constant 1 : i32
    %1 = arith.subi %0, %c1_i32 : i32
    %c0_i32 = arith.constant 0 : i32
    %2 = arith.maxsi %1, %c0_i32 : i32
    %c0_i32_0 = arith.constant 0 : i32
    %c0_i32_1 = arith.constant 0 : i32
    %c0_i32_2 = arith.constant 0 : i32
    return %arg0, %2, %c0_i32_0, %c0_i32_1 : i32, i32, i32, i32
  }
  func.func @transform_2(%arg0: i32, %arg1: i32) -> (i32, i32, i32, i32) {
    %c8_i32 = arith.constant 8 : i32
    %0 = arith.muli %arg1, %c8_i32 : i32
    %c8_i32_0 = arith.constant 8 : i32
    %1 = arith.addi %0, %c8_i32_0 : i32
    %c15_i32 = arith.constant 15 : i32
    %2 = arith.minsi %1, %c15_i32 : i32
    %c0_i32 = arith.constant 0 : i32
    %c0_i32_1 = arith.constant 0 : i32
    %c0_i32_2 = arith.constant 0 : i32
    return %arg0, %2, %c0_i32, %c0_i32_1 : i32, i32, i32, i32
  }
  func.func @transform_3(%arg0: i32, %arg1: i32) -> (i32, i32) {
    %c0_i32 = arith.constant 0 : i32
    %c0_i32_0 = arith.constant 0 : i32
    %c0_i32_1 = arith.constant 0 : i32
    return %c0_i32, %c0_i32_0 : i32, i32
  }
  func.func @transform_4(%arg0: i32, %arg1: i32) -> (i32, i32) {
    %c0_i32 = arith.constant 0 : i32
    %c0_i32_0 = arith.constant 0 : i32
    %c0_i32_1 = arith.constant 0 : i32
    return %c0_i32, %c0_i32_0 : i32, i32
  }
  func.func @transform_5(%arg0: i32, %arg1: i32) -> (i32, i32, i32) {
    %c0_i32 = arith.constant 0 : i32
    %c0_i32_0 = arith.constant 0 : i32
    return %arg0, %arg1, %c0_i32 : i32, i32, i32
  }
  func.func @transform_6(%arg0: i32, %arg1: i32) -> (i32, i32, i32, i32) {
    %c0_i32 = arith.constant 0 : i32
    %c0_i32_0 = arith.constant 0 : i32
    %c0_i32_1 = arith.constant 0 : i32
    return %arg0, %arg1, %c0_i32, %c0_i32_0 : i32, i32, i32, i32
  }
  func.func @transform_7(%arg0: i32, %arg1: i32) -> (i32, i32, i32, i32) {
    %c0_i32 = arith.constant 0 : i32
    %c0_i32_0 = arith.constant 0 : i32
    %c0_i32_1 = arith.constant 0 : i32
    return %arg0, %arg1, %c0_i32, %c0_i32_0 : i32, i32, i32, i32
  }
}

</mosaic_0001>

<llo_original>
// kernel: tpu_custom_call.1
$region0: #{tpu_custom_call.1}
  #allocation0 [shape = 'u32[]', space=smem, size = 0x4, offset = 0x4, fixed_abs, tag = 'smem constant byte address 0x4 - core index']
  #allocation1 [shape = 'u32[144,128]{1,0:T(1,128)}', space=vmem, size = 0x12000, scoped, tag = 'internal scratch']
  %s0 = inlined_call_operand.vmem [shape: bf16[2,16,16,4], index: 0, kind: input, shape index: {}]
  %s1 = inlined_call_operand.vmem [shape: bf16[2,16,16,4], index: 1, kind: input, shape index: {}]
  %s2 = inlined_call_operand.vmem [shape: bf16[2,16,16,4], index: 2, kind: input, shape index: {}]
  %s3 = inlined_call_operand.vmem [shape: bf16[36,8], index: 3, kind: input, shape index: {}]
  %s4 = inlined_call_operand.vmem [shape: f32[1,8], index: 4, kind: input, shape index: {}]
  %s5 = inlined_call_operand.vmem [shape: bf16[2,256,8], index: 5, kind: output, shape index: {0}]
  %s6 = inlined_call_operand.hbm [shape: f32[2,2,1,8], index: 6, kind: output, shape index: {1}]
  %s7 = inlined_call_operand.hbm [shape: f32[2,2,1,8], index: 7, kind: output, shape index: {2}]
  %8 = xla_tuple %s5, %s6, %s7
  %s9 = sld [smem:[#allocation0]]
  $region69: #{tpu_custom_call.1} parent=0
    _
  %s11 = ssub.s32 1, %s9
  %s12 = scalar_select 0, %s11, %s9
  $region1: #{tpu_custom_call.1} parent=0
    #allocation2 [shape = 'u8[1024]{0}', space=vmem, size = 0x400, scoped, tag = 'output window, operand 1']
    #allocation3 [shape = 's32[2]{0}', space=sflag, size = 0x8, scoped, tag = 'scoped memory for tpu_custom_call.1']
    #allocation4 [shape = 'u8[1024]{0}', space=vmem, size = 0x400, scoped, tag = 'output window, operand 2']
    #allocation5 [shape = 's32[2]{0}', space=sflag, size = 0x8, scoped, tag = 'scoped memory for tpu_custom_call.1']
    %13 = vsyncpa [#allocation3], 0
    %s14 = scalar_lea.sflag [#allocation3], 1
    %15 = vsyncpa %s14, 0
    %16 = vsyncpa [#allocation5], 0
    %s17 = scalar_lea.sflag [#allocation5], 1
    %18 = vsyncpa %s17, 0
    loop: start=0, step=1, limit=6
    $region2: #{tpu_custom_call.1} parent=1 // loop_pre_header
      _
    $region3: #{tpu_custom_call.1} parent=1 // loop_header
      %s20 = sphi 0, %s24
      %p21 = scmp.ge.s32.totalorder %s20, 6
      %s27 = sphi 0, %s39
      %s28 = sphi 0, %s35
      %s29 = sphi 0, %s27
      %s30 = sphi 0, %s28
      %s31 = sphi 0, %s29
      %s32 = sphi 0, %s30
      %s44 = sphi 0, %s46
      %s47 = sphi 0, %s44
      %s48 = sphi 0, %s47
      %s64 = sphi 0, %s48
      %s80 = sphi 0, %s82
      %s83 = sphi 0, %s80
      %s84 = sphi 0, %s83
      %s100 = sphi 0, %s84
      %s116 = sphi 0, %s118
      %s119 = sphi 0, %s116
      %s120 = sphi 0, %s119
      %s136 = sphi 0, %s120
      %s140 = sphi 0, %s140
      %s142 = sphi 0, %s140
      %s143 = sphi 0, %s142
      %s157 = sphi 0, %s143
      %s161 = sphi 0, %s161
      %s163 = sphi 0, %s161
      %s164 = sphi 0, %s163
      %s178 = sphi 0, %s164
      %s186 = sphi 0, %s188
      %s189 = sphi 0, %s186
      %s190 = sphi 0, %s189
      %s206 = sphi 0, %s190
      %s214 = sphi 0, %s216
      %s217 = sphi 0, %s214
      %s218 = sphi 0, %s217
      %s234 = sphi 0, %s218
      %s242 = sphi 0, %s244
      %s245 = sphi 0, %s242
      %s246 = sphi 0, %s245
      %s262 = sphi 0, %s246
    $region4: #{tpu_custom_call.1} parent=1 // loop_header_branch
      %23 = sbr.rel (%p21) target = $region8
    $region5: #{tpu_custom_call.1} parent=1 // loop_body
      %s25 = ssub.s32 %s20, 1
      %s26 = ssub.s32 %s20, 2
      %s33 = sadd.s32 1, %s28
      %p34 = scmp.ge.s32.totalorder %s33, 2
      %s35 = scalar_select %p34, 0, %s33
      %s36 = sadd.s32 1, %s27
      %s37 = scalar_select %p34, %s36, %s27
      %p38 = scmp.ge.s32.totalorder %s37, 2
      %s39 = scalar_select %p38, 0, %s37
      %s40 = ssub.s32 %s27, %s39
      %s41 = ssub.s32 %s28, %s35
      %s42 = sor.u32 %s40, %s41
      %p43 = scmp.eq.s32.totalorder %s42, 0
      %s45 = sadd.s32 %s44, 1
      %s46 = scalar_select %p43, %s44, %s45
      %p49 = pneg %p43
      %p50 = scmp.eq.s32.totalorder %s20, 3
      %p51 = por %p49, %p50
      %p52 = scmp.ne.s32.totalorder %s44, %s47
      %p53 = scmp.eq.s32.totalorder %s20, 0
      %p54 = por %p52, %p53
      %p55 = scmp.ne.s32.totalorder %s44, %s47
      %p56 = scmp.eq.s32.totalorder %s25, 3
      %p57 = por %p55, %p56
      %p58 = scmp.ne.s32.totalorder %s47, %s48
      %p59 = scmp.eq.s32.totalorder %s25, 0
      %p60 = por %p58, %p59
      %p61 = scmp.ne.s32.totalorder %s47, %s48
      %p62 = scmp.eq.s32.totalorder %s26, 3
      %p63 = por %p61, %p62
      %p65 = scmp.ne.s32.totalorder %s48, %s64
      %p66 = scmp.eq.s32.totalorder %s26, 0
      %p67 = por %p65, %p66
      %s68 = smul.u32 %s28, 8
      %s69 = ssub.s32 %s68, 1
      %p70 = scmp.gt.s32.totalorder %s69, 0
      %s71 = scalar_select %p70, %s69, 0
      %s72 = smul.u32 %s35, 8
      %s73 = ssub.s32 %s72, 1
      %p74 = scmp.gt.s32.totalorder %s73, 0
      %s75 = scalar_select %p74, %s73, 0
      %s76 = ssub.s32 %s27, %s39
      %s77 = ssub.s32 %s71, %s75
      %s78 = sor.u32 %s76, %s77
      %p79 = scmp.eq.s32.totalorder %s78, 0
      %s81 = sadd.s32 %s80, 1
      %s82 = scalar_select %p79, %s80, %s81
      %p85 = pneg %p79
      %p86 = scmp.eq.s32.totalorder %s20, 3
      %p87 = por %p85, %p86
      %p88 = scmp.ne.s32.totalorder %s80, %s83
      %p89 = scmp.eq.s32.totalorder %s20, 0
      %p90 = por %p88, %p89
      %p91 = scmp.ne.s32.totalorder %s80, %s83
      %p92 = scmp.eq.s32.totalorder %s25, 3
      %p93 = por %p91, %p92
      %p94 = scmp.ne.s32.totalorder %s83, %s84
      %p95 = scmp.eq.s32.totalorder %s25, 0
      %p96 = por %p94, %p95
      %p97 = scmp.ne.s32.totalorder %s83, %s84
      %p98 = scmp.eq.s32.totalorder %s26, 3
      %p99 = por %p97, %p98
      %p101 = scmp.ne.s32.totalorder %s84, %s100
      %p102 = scmp.eq.s32.totalorder %s26, 0
      %p103 = por %p101, %p102
      %s104 = smul.u32 %s28, 8
      %s105 = sadd.s32 %s104, 8
      %p106 = scmp.lt.s32.totalorder %s105, 15
      %s107 = scalar_select %p106, %s105, 15
      %s108 = smul.u32 %s35, 8
      %s109 = sadd.s32 %s108, 8
      %p110 = scmp.lt.s32.totalorder %s109, 15
      %s111 = scalar_select %p110, %s109, 15
      %s112 = ssub.s32 %s27, %s39
      %s113 = ssub.s32 %s107, %s111
      %s114 = sor.u32 %s112, %s113
      %p115 = scmp.eq.s32.totalorder %s114, 0
      %s117 = sadd.s32 %s116, 1
      %s118 = scalar_select %p115, %s116, %s117
      %p121 = pneg %p115
      %p122 = scmp.eq.s32.totalorder %s20, 3
      %p123 = por %p121, %p122
      %p124 = scmp.ne.s32.totalorder %s116, %s119
      %p125 = scmp.eq.s32.totalorder %s20, 0
      %p126 = por %p124, %p125
      %p127 = scmp.ne.s32.totalorder %s116, %s119
      %p128 = scmp.eq.s32.totalorder %s25, 3
      %p129 = por %p127, %p128
      %p130 = scmp.ne.s32.totalorder %s119, %s120
      %p131 = scmp.eq.s32.totalorder %s25, 0
      %p132 = por %p130, %p131
      %p133 = scmp.ne.s32.totalorder %s119, %s120
      %p134 = scmp.eq.s32.totalorder %s26, 3
      %p135 = por %p133, %p134
      %p137 = scmp.ne.s32.totalorder %s120, %s136
      %p138 = scmp.eq.s32.totalorder %s26, 0
      %p139 = por %p137, %p138
      %s141 = sadd.s32 %s140, 1
      %p144 = scmp.eq.s32.totalorder %s20, 3
      %p145 = scmp.ne.s32.totalorder %s140, %s142
      %p146 = scmp.eq.s32.totalorder %s20, 0
      %p147 = por %p145, %p146
      %p148 = scmp.ne.s32.totalorder %s140, %s142
      %p149 = scmp.eq.s32.totalorder %s25, 3
      %p150 = por %p148, %p149
      %p151 = scmp.ne.s32.totalorder %s142, %s143
      %p152 = scmp.eq.s32.totalorder %s25, 0
      %p153 = por %p151, %p152
      %p154 = scmp.ne.s32.totalorder %s142, %s143
      %p155 = scmp.eq.s32.totalorder %s26, 3
      %p156 = por %p154, %p155
      %p158 = scmp.ne.s32.totalorder %s143, %s157
      %p159 = scmp.eq.s32.totalorder %s26, 0
      %p160 = por %p158, %p159
      %s162 = sadd.s32 %s161, 1
      %p165 = scmp.eq.s32.totalorder %s20, 3
      %p166 = scmp.ne.s32.totalorder %s161, %s163
      %p167 = scmp.eq.s32.totalorder %s20, 0
      %p168 = por %p166, %p167
      %p169 = scmp.ne.s32.totalorder %s161, %s163
      %p170 = scmp.eq.s32.totalorder %s25, 3
      %p171 = por %p169, %p170
      %p172 = scmp.ne.s32.totalorder %s163, %s164
      %p173 = scmp.eq.s32.totalorder %s25, 0
      %p174 = por %p172, %p173
      %p175 = scmp.ne.s32.totalorder %s163, %s164
      %p176 = scmp.eq.s32.totalorder %s26, 3
      %p177 = por %p175, %p176
      %p179 = scmp.ne.s32.totalorder %s164, %s178
      %p180 = scmp.eq.s32.totalorder %s26, 0
      %p181 = por %p179, %p180
      %s182 = ssub.s32 %s27, %s39
      %s183 = ssub.s32 %s28, %s35
      %s184 = sor.u32 %s182, %s183
      %p185 = scmp.eq.s32.totalorder %s184, 0
      %s187 = sadd.s32 %s186, 1
      %s188 = scalar_select %p185, %s186, %s187
      %p191 = pneg %p185
      %p192 = scmp.eq.s32.totalorder %s20, 3
      %p193 = por %p191, %p192
      %p194 = scmp.ne.s32.totalorder %s186, %s189
      %p195 = scmp.eq.s32.totalorder %s20, 0
      %p196 = por %p194, %p195
      %p197 = scmp.ne.s32.totalorder %s186, %s189
      %p198 = scmp.eq.s32.totalorder %s25, 3
      %p199 = por %p197, %p198
      %p200 = scmp.ne.s32.totalorder %s189, %s190
      %p201 = scmp.eq.s32.totalorder %s25, 0
      %p202 = por %p200, %p201
      %p203 = scmp.ne.s32.totalorder %s189, %s190
      %p204 = scmp.eq.s32.totalorder %s26, 3
      %p205 = por %p203, %p204
      %p207 = scmp.ne.s32.totalorder %s190, %s206
      %p208 = scmp.eq.s32.totalorder %s26, 0
      %p209 = por %p207, %p208
      %s210 = ssub.s32 %s27, %s39
      %s211 = ssub.s32 %s28, %s35
      %s212 = sor.u32 %s210, %s211
      %p213 = scmp.eq.s32.totalorder %s212, 0
      %s215 = sadd.s32 %s214, 1
      %s216 = scalar_select %p213, %s214, %s215
      %p219 = pneg %p213
      %p220 = scmp.eq.s32.totalorder %s20, 3
      %p221 = por %p219, %p220
      %p222 = scmp.ne.s32.totalorder %s214, %s217
      %p223 = scmp.eq.s32.totalorder %s20, 0
      %p224 = por %p222, %p223
      %p225 = scmp.ne.s32.totalorder %s214, %s217
      %p226 = scmp.eq.s32.totalorder %s25, 3
      %p227 = por %p225, %p226
      %p228 = scmp.ne.s32.totalorder %s217, %s218
      %p229 = scmp.eq.s32.totalorder %s25, 0
      %p230 = por %p228, %p229
      %p231 = scmp.ne.s32.totalorder %s217, %s218
      %p232 = scmp.eq.s32.totalorder %s26, 3
      %p233 = por %p231, %p232
      %p235 = scmp.ne.s32.totalorder %s218, %s234
      %p236 = scmp.eq.s32.totalorder %s26, 0
      %p237 = por %p235, %p236
      %s238 = ssub.s32 %s27, %s39
      %s239 = ssub.s32 %s28, %s35
      %s240 = sor.u32 %s238, %s239
      %p241 = scmp.eq.s32.totalorder %s240, 0
      %s243 = sadd.s32 %s242, 1
      %s244 = scalar_select %p241, %s242, %s243
      %p247 = pneg %p241
      %p248 = scmp.eq.s32.totalorder %s20, 3
      %p249 = por %p247, %p248
      %p250 = scmp.ne.s32.totalorder %s242, %s245
      %p251 = scmp.eq.s32.totalorder %s20, 0
      %p252 = por %p250, %p251
      %p253 = scmp.ne.s32.totalorder %s242, %s245
      %p254 = scmp.eq.s32.totalorder %s25, 3
      %p255 = por %p253, %p254
      %p256 = scmp.ne.s32.totalorder %s245, %s246
      %p257 = scmp.eq.s32.totalorder %s25, 0
      %p258 = por %p256, %p257
      %p259 = scmp.ne.s32.totalorder %s245, %s246
      %p260 = scmp.eq.s32.totalorder %s26, 3
      %p261 = por %p259, %p260
      %p263 = scmp.ne.s32.totalorder %s246, %s262
      %p264 = scmp.eq.s32.totalorder %s26, 0
      %p265 = por %p263, %p264
      %p266 = scmp.le.s32.totalorder 1, %s20
      %p267 = scmp.lt.s32.totalorder %s20, 5
      %p268 = pnand %p266, %p267
      %p269 = pneg %p268
      // Predicated region
      $region9: #{tpu_custom_call.1} parent=5 // pred_check
        _
      $region10: #{tpu_custom_call.1} parent=5 // pred_check_branch
        %271 = sbr.rel (%p268) target = $region12
      $region11: #{tpu_custom_call.1} parent=5 // pred_region
        %s272 = ssub.s32 %s20, 1
        // Predicated region
        $region13: #{tpu_custom_call.1} parent=11 // pred_check
          %p273 = pneg %p153
        $region14: #{tpu_custom_call.1} parent=11 // pred_check_branch
          %275 = sbr.rel (%p273) target = $region16
        $region15: #{tpu_custom_call.1} parent=11 // pred_region
          _
        $region16: #{tpu_custom_call.1} parent=11 // pred_fallthru
          _
        // Predicated region
        $region17: #{tpu_custom_call.1} parent=11 // pred_check
          %p276 = pneg %p174
        $region18: #{tpu_custom_call.1} parent=11 // pred_check_branch
          %278 = sbr.rel (%p276) target = $region20
        $region19: #{tpu_custom_call.1} parent=11 // pred_region
          _
        $region20: #{tpu_custom_call.1} parent=11 // pred_fallthru
          _
      $region12: #{tpu_custom_call.1} parent=5 // pred_fallthru
        _
      %p279 = scmp.lt.s32.totalorder %s20, 4
      // Predicated region
      $region21: #{tpu_custom_call.1} parent=5 // pred_check
        %p280 = pneg %p279
      $region22: #{tpu_custom_call.1} parent=5 // pred_check_branch
        %282 = sbr.rel (%p280) target = $region24
      $region23: #{tpu_custom_call.1} parent=5 // pred_region
        // Predicated region
        $region25: #{tpu_custom_call.1} parent=23 // pred_check
          %p283 = pneg %p54
        $region26: #{tpu_custom_call.1} parent=23 // pred_check_branch
          %285 = sbr.rel (%p283) target = $region28
        $region27: #{tpu_custom_call.1} parent=23 // pred_region
          %s286 = smul.u32 8, %s28
          %p287 = scmp.lt.s32.totalorder %s27, 1
          %s288 = scalar_select %p287, %s27, 1
          %p289 = scmp.lt.s32.totalorder %s286, 15
          %s290 = scalar_select %p289, %s286, 15
          %s291 = smul.addr %s290, 2
          %s292 = smul.addr %s288, 32
          %s293 = sadd.s32 %s291, %s292
          %s294 = smul.addr %s293, 4
          %s295 = scalar_lea.vmem %s0, %s294
          %s296 = smul.u32 8, %s28
        $region28: #{tpu_custom_call.1} parent=23 // pred_fallthru
          _
        // Predicated region
        $region29: #{tpu_custom_call.1} parent=23 // pred_check
          %p297 = pneg %p90
        $region30: #{tpu_custom_call.1} parent=23 // pred_check_branch
          %299 = sbr.rel (%p297) target = $region32
        $region31: #{tpu_custom_call.1} parent=23 // pred_region
          %s300 = smul.u32 %s28, 8
          %s301 = ssub.s32 %s300, 1
          %p302 = scmp.gt.s32.totalorder %s301, 0
          %s303 = scalar_select %p302, %s301, 0
          %p304 = scmp.lt.s32.totalorder %s27, 1
          %s305 = scalar_select %p304, %s27, 1
          %p306 = scmp.lt.s32.totalorder %s303, 15
          %s307 = scalar_select %p306, %s303, 15
          %s308 = smul.addr %s307, 2
          %s309 = smul.addr %s305, 32
          %s310 = sadd.s32 %s308, %s309
          %s311 = smul.addr %s310, 4
          %s312 = scalar_lea.vmem %s1, %s311
          %s313 = smul.u32 %s28, 8
          %s314 = ssub.s32 %s313, 1
          %p315 = scmp.gt.s32.totalorder %s314, 0
          %s316 = scalar_select %p315, %s314, 0
        $region32: #{tpu_custom_call.1} parent=23 // pred_fallthru
          _
        // Predicated region
        $region33: #{tpu_custom_call.1} parent=23 // pred_check
          %p317 = pneg %p126
        $region34: #{tpu_custom_call.1} parent=23 // pred_check_branch
          %319 = sbr.rel (%p317) target = $region36
        $region35: #{tpu_custom_call.1} parent=23 // pred_region
          %s320 = smul.u32 %s28, 8
          %s321 = sadd.s32 %s320, 8
          %p322 = scmp.lt.s32.totalorder %s321, 15
          %s323 = scalar_select %p322, %s321, 15
          %p324 = scmp.lt.s32.totalorder %s27, 1
          %s325 = scalar_select %p324, %s27, 1
          %p326 = scmp.lt.s32.totalorder %s323, 15
          %s327 = scalar_select %p326, %s323, 15
          %s328 = smul.addr %s327, 2
          %s329 = smul.addr %s325, 32
          %s330 = sadd.s32 %s328, %s329
          %s331 = smul.addr %s330, 4
          %s332 = scalar_lea.vmem %s2, %s331
          %s333 = smul.u32 %s28, 8
          %s334 = sadd.s32 %s333, 8
          %p335 = scmp.lt.s32.totalorder %s334, 15
          %s336 = scalar_select %p335, %s334, 15
        $region36: #{tpu_custom_call.1} parent=23 // pred_fallthru
          _
      $region24: #{tpu_custom_call.1} parent=5 // pred_fallthru
        _
      %p337 = scmp.le.s32.totalorder 1, %s20
      %p338 = scmp.lt.s32.totalorder %s20, 5
      %p339 = pnand %p337, %p338
      %p340 = pneg %p339
      // Predicated region
      $region37: #{tpu_custom_call.1} parent=5 // pred_check
        _
      $region38: #{tpu_custom_call.1} parent=5 // pred_check_branch
        %342 = sbr.rel (%p339) target = $region40
      $region39: #{tpu_custom_call.1} parent=5 // pred_region
        %s343 = ssub.s32 %s20, 1
        %s344 = smul.u32 8, %s30
        %p345 = scmp.lt.s32.totalorder %s29, 1
        %s346 = scalar_select %p345, %s29, 1
        %p347 = scmp.lt.s32.totalorder %s344, 15
        %s348 = scalar_select %p347, %s344, 15
        %s349 = smul.addr %s348, 2
        %s350 = smul.addr %s346, 32
        %s351 = sadd.s32 %s349, %s350
        %s352 = smul.addr %s351, 4
        %s353 = scalar_lea.vmem %s0, %s352
        %p354 = pneg %p60
        %p355 = pneg %p57
        %s356 = smul.u32 %s30, 8
        %s357 = ssub.s32 %s356, 1
        %p358 = scmp.gt.s32.totalorder %s357, 0
        %s359 = scalar_select %p358, %s357, 0
        %p360 = scmp.lt.s32.totalorder %s29, 1
        %s361 = scalar_select %p360, %s29, 1
        %p362 = scmp.lt.s32.totalorder %s359, 15
        %s363 = scalar_select %p362, %s359, 15
        %s364 = smul.addr %s363, 2
        %s365 = smul.addr %s361, 32
        %s366 = sadd.s32 %s364, %s365
        %s367 = smul.addr %s366, 4
        %s368 = scalar_lea.vmem %s1, %s367
        %p369 = pneg %p96
        %p370 = pneg %p93
        %s371 = smul.u32 %s30, 8
        %s372 = sadd.s32 %s371, 8
        %p373 = scmp.lt.s32.totalorder %s372, 15
        %s374 = scalar_select %p373, %s372, 15
        %p375 = scmp.lt.s32.totalorder %s29, 1
        %s376 = scalar_select %p375, %s29, 1
        %p377 = scmp.lt.s32.totalorder %s374, 15
        %s378 = scalar_select %p377, %s374, 15
        %s379 = smul.addr %s378, 2
        %s380 = smul.addr %s376, 32
        %s381 = sadd.s32 %s379, %s380
        %s382 = smul.addr %s381, 4
        %s383 = scalar_lea.vmem %s2, %s382
        %p384 = pneg %p132
        %p385 = pneg %p129
        %p386 = pneg %p153
        %p387 = pneg %p150
        %p388 = pneg %p174
        %p389 = pneg %p171
        %p390 = pneg %p202
        %p391 = pneg %p199
        %s392 = smul.u32 16, %s30
        %p393 = scmp.lt.s32.totalorder %s29, 1
        %s394 = scalar_select %p393, %s29, 1
        %p395 = scmp.lt.s32.totalorder %s392, 31
        %s396 = scalar_select %p395, %s392, 31
        %s397 = smul.addr %s394, 32
        %s398 = sadd.s32 %s396, %s397
        %s399 = smul.addr %s398, 4
        %s400 = scalar_lea.vmem %s5, %s399
        %p401 = pneg %p230
        %p402 = pneg %p227
        %s403 = sand.u32 %s217, 1
        %s404 = scalar_lea.sflag [#allocation3], %s403
        %s405 = sand.u32 %s217, 1
        %s406 = scalar_lea.vmem [#allocation2], %s405
        %p407 = pneg %p258
        %p408 = pneg %p255
        %s409 = sand.u32 %s245, 1
        %s410 = scalar_lea.sflag [#allocation5], %s409
        %s411 = sand.u32 %s245, 1
        %s412 = scalar_lea.vmem [#allocation4], %s411
        %s413 = smul.u32 8, %s30
        %p414 = scmp.lt.s32.totalorder %s29, 1
        %s415 = scalar_select %p414, %s29, 1
        %p416 = scmp.lt.s32.totalorder %s413, 15
        %s417 = scalar_select %p416, %s413, 15
        %s418 = smul.addr %s417, 2
        %s419 = smul.addr %s415, 32
        %s420 = sadd.s32 %s418, %s419
        %s421 = smul.addr %s420, 4
        %s422 = scalar_lea.vmem %s0, %s421
        %s423 = smul.u32 8, %s30
        %s424 = smul.u32 %s30, 8
        %s425 = ssub.s32 %s424, 1
        %p426 = scmp.gt.s32.totalorder %s425, 0
        %s427 = scalar_select %p426, %s425, 0
        %p428 = scmp.lt.s32.totalorder %s29, 1
        %s429 = scalar_select %p428, %s29, 1
        %p430 = scmp.lt.s32.totalorder %s427, 15
        %s431 = scalar_select %p430, %s427, 15
        %s432 = smul.addr %s431, 2
        %s433 = smul.addr %s429, 32
        %s434 = sadd.s32 %s432, %s433
        %s435 = smul.addr %s434, 4
        %s436 = scalar_lea.vmem %s1, %s435
        %s437 = smul.u32 %s30, 8
        %s438 = ssub.s32 %s437, 1
        %p439 = scmp.gt.s32.totalorder %s438, 0
        %s440 = scalar_select %p439, %s438, 0
        %s441 = smul.u32 %s30, 8
        %s442 = sadd.s32 %s441, 8
        %p443 = scmp.lt.s32.totalorder %s442, 15
        %s444 = scalar_select %p443, %s442, 15
        %p445 = scmp.lt.s32.totalorder %s29, 1
        %s446 = scalar_select %p445, %s29, 1
        %p447 = scmp.lt.s32.totalorder %s444, 15
        %s448 = scalar_select %p447, %s444, 15
        %s449 = smul.addr %s448, 2
        %s450 = smul.addr %s446, 32
        %s451 = sadd.s32 %s449, %s450
        %s452 = smul.addr %s451, 4
        %s453 = scalar_lea.vmem %s2, %s452
        %s454 = smul.u32 %s30, 8
        %s455 = sadd.s32 %s454, 8
        %p456 = scmp.lt.s32.totalorder %s455, 15
        %s457 = scalar_select %p456, %s455, 15
        %s458 = smul.u32 16, %s30
        %p459 = scmp.lt.s32.totalorder %s29, 1
        %s460 = scalar_select %p459, %s29, 1
        %p461 = scmp.lt.s32.totalorder %s458, 31
        %s462 = scalar_select %p461, %s458, 31
        %s463 = smul.addr %s460, 32
        %s464 = sadd.s32 %s462, %s463
        %s465 = smul.addr %s464, 4
        %s466 = scalar_lea.vmem %s5, %s465
        %s467 = smul.u32 16, %s30
        %v469 = vld [vmem:[%s422] sm:$0xf]
        %v470 = vld [vmem:[%s422 + $0x4] sm:$0xf]
        %v471 = vld [vmem:[%s422 + $0x8] sm:$0xf]
        %v472 = vld [vmem:[%s422 + $0xc] sm:$0xf]
        %v473 = vld [vmem:[%s422 + $0x10] sm:$0xf]
        %v474 = vld [vmem:[%s422 + $0x14] sm:$0xf]
        %v475 = vld [vmem:[%s422 + $0x18] sm:$0xf]
        %v476 = vld [vmem:[%s422 + $0x1c] sm:$0xf]
        %v477 = vld [vmem:[%s422 + $0x20] sm:$0xf]
        %v478 = vld [vmem:[%s422 + $0x24] sm:$0xf]
        %v479 = vld [vmem:[%s422 + $0x28] sm:$0xf]
        %v480 = vld [vmem:[%s422 + $0x2c] sm:$0xf]
        %v481 = vld [vmem:[%s422 + $0x30] sm:$0xf]
        %v482 = vld [vmem:[%s422 + $0x34] sm:$0xf]
        %v483 = vld [vmem:[%s422 + $0x38] sm:$0xf]
        %v484 = vld [vmem:[%s422 + $0x3c] sm:$0xf]
        %v485 = vld [vmem:[%s436] sm:$0xf]
        %v486 = vld [vmem:[%s436 + $0x4] sm:$0xf]
        %v487 = vld [vmem:[%s453] sm:$0xf]
        %v488 = vld [vmem:[%s453 + $0x4] sm:$0xf]
        %p489 = scmp.eq.s32.totalorder %s30, 0
        %s490 = scalar_select %p489, 1, 0
        %v491 = vstv %s490
        %vm492 = vcmp.eq.s32.totalorder %v491, 1
        %v493 = vsel %vm492, 0, %v485
        %v494 = vsel %vm492, 0, %v486
        %p495 = scmp.eq.s32.totalorder %s30, 1
        %s496 = scalar_select %p495, 1, 0
        %v497 = vstv %s496
        %vm498 = vcmp.eq.s32.totalorder %v497, 1
        %v499 = vsel %vm498, 0, %v487
        %v500 = vsel %vm498, 0, %v488
        %v517 = vunpack.c.l.b16 %v493
        %v518 = vunpack.c.l.b16 %v494
        %v519 = vunpack.c.l.b16 %v469
        %v520 = vunpack.c.l.b16 %v470
        %v521 = vunpack.c.l.b16 %v471
        %v522 = vunpack.c.l.b16 %v472
        %v523 = vunpack.c.l.b16 %v473
        %v524 = vunpack.c.l.b16 %v474
        %v525 = vunpack.c.l.b16 %v475
        %v526 = vunpack.c.l.b16 %v476
        %v527 = vunpack.c.l.b16 %v477
        %v528 = vunpack.c.l.b16 %v478
        %v529 = vunpack.c.l.b16 %v479
        %v530 = vunpack.c.l.b16 %v480
        %v531 = vunpack.c.l.b16 %v481
        %v532 = vunpack.c.l.b16 %v482
        %v533 = vpack.c.b16 %v518, %v517
        %v534 = vpack.c.b16 %v520, %v519
        %v535 = vpack.c.b16 %v522, %v521
        %v536 = vpack.c.b16 %v524, %v523
        %v537 = vpack.c.b16 %v526, %v525
        %v538 = vpack.c.b16 %v528, %v527
        %v539 = vpack.c.b16 %v530, %v529
        %v540 = vpack.c.b16 %v532, %v531
        %v542 = vshrl.u32 %v533, 16
        %v544 = vrot.slane %v542, 7
        %v545 = vshll.u32 %v533, 16
        %v547 = vor.u32 %v544, %v545
        %v549 = vshrl.u32 %v534, 16
        %v551 = vrot.slane %v549, 7
        %v552 = vshll.u32 %v534, 16
        %v554 = vor.u32 %v551, %v552
        %v556 = vshrl.u32 %v535, 16
        %v558 = vrot.slane %v556, 7
        %v559 = vshll.u32 %v535, 16
        %v561 = vor.u32 %v558, %v559
        %v563 = vshrl.u32 %v536, 16
        %v565 = vrot.slane %v563, 7
        %v566 = vshll.u32 %v536, 16
        %v568 = vor.u32 %v565, %v566
        %v570 = vshrl.u32 %v537, 16
        %v572 = vrot.slane %v570, 7
        %v573 = vshll.u32 %v537, 16
        %v575 = vor.u32 %v572, %v573
        %v577 = vshrl.u32 %v538, 16
        %v579 = vrot.slane %v577, 7
        %v580 = vshll.u32 %v538, 16
        %v582 = vor.u32 %v579, %v580
        %v584 = vshrl.u32 %v539, 16
        %v586 = vrot.slane %v584, 7
        %v587 = vshll.u32 %v539, 16
        %v589 = vor.u32 %v586, %v587
        %v591 = vshrl.u32 %v540, 16
        %v593 = vrot.slane %v591, 7
        %v594 = vshll.u32 %v540, 16
        %v596 = vor.u32 %v593, %v594
        %vm605 = vcmask 1040384
        %vm606 = vsmask.f32 256
        %vm607 = vmand %vm605, %vm606
        %v608 = vsel %vm607, 0, %v547
        %v609 = vsel %vm607, 0, %v554
        %v610 = vsel %vm607, 0, %v561
        %v611 = vsel %vm607, 0, %v568
        %v612 = vsel %vm607, 0, %v575
        %v613 = vsel %vm607, 0, %v582
        %v614 = vsel %vm607, 0, %v589
        %v615 = vsel %vm607, 0, %v596
        %v616 = vrot.slane %v545, 1
        %v617 = vor.u32 %v542, %v616
        %v618 = vrot.slane %v552, 1
        %v619 = vor.u32 %v549, %v618
        %v620 = vrot.slane %v559, 1
        %v621 = vor.u32 %v556, %v620
        %v622 = vrot.slane %v566, 1
        %v623 = vor.u32 %v563, %v622
        %v624 = vrot.slane %v573, 1
        %v625 = vor.u32 %v570, %v624
        %v626 = vrot.slane %v580, 1
        %v627 = vor.u32 %v577, %v626
        %v628 = vrot.slane %v587, 1
        %v629 = vor.u32 %v584, %v628
        %v630 = vrot.slane %v594, 1
        %v631 = vor.u32 %v591, %v630
        %vm640 = vcmask 1047552
        %vm641 = vsmask.f32 7424
        %vm642 = vmand %vm640, %vm641
        %v643 = vsel %vm642, %v617, 0
        %v644 = vsel %vm642, %v619, 0
        %v645 = vsel %vm642, %v621, 0
        %v646 = vsel %vm642, %v623, 0
        %v647 = vsel %vm642, %v625, 0
        %v648 = vsel %vm642, %v627, 0
        %v649 = vsel %vm642, %v629, 0
        %v650 = vsel %vm642, %v631, 0
        %v653 = vunpack.c.l.b16 %v483
        %v654 = vunpack.c.l.b16 %v484
        %v655 = vpack.c.b16 %v654, %v653
        %v657 = vshrl.u32 %v655, 16
        %v659 = vrot.slane %v657, 7
        %v660 = vshll.u32 %v655, 16
        %v662 = vor.u32 %v659, %v660
        %v664 = vsel %vm607, 0, %v662
        %v665 = vrot.slane %v660, 1
        %v666 = vor.u32 %v657, %v665
        %v668 = vsel %vm642, %v666, 0
        %v671 = vunpack.c.l.b16 %v499
        %v672 = vunpack.c.l.b16 %v500
        %v673 = vpack.c.b16 %v672, %v671
        %v675 = vshrl.u32 %v673, 16
        %v677 = vrot.slane %v675, 7
        %v678 = vshll.u32 %v673, 16
        %v680 = vor.u32 %v677, %v678
        %v682 = vsel %vm607, 0, %v680
        %v683 = vrot.slane %v678, 1
        %v684 = vor.u32 %v675, %v683
        %v686 = vsel %vm642, %v684, 0
        %687 = vrot.lane.b32.xlu0 %v533, 4
        %v688 = vpop.permute.xlu0 %687
        %689 = vrot.lane.b32.xlu0 %v534, 4
        %v690 = vpop.permute.xlu0 %689
        %691 = vrot.lane.b32.xlu0 %v535, 4
        %v692 = vpop.permute.xlu0 %691
        %693 = vrot.lane.b32.xlu0 %v536, 4
        %v694 = vpop.permute.xlu0 %693
        %695 = vrot.lane.b32.xlu0 %v537, 4
        %v696 = vpop.permute.xlu0 %695
        %697 = vrot.lane.b32.xlu0 %v538, 4
        %v698 = vpop.permute.xlu0 %697
        %699 = vrot.lane.b32.xlu0 %v539, 4
        %v700 = vpop.permute.xlu0 %699
        %701 = vrot.lane.b32.xlu0 %v540, 4
        %v702 = vpop.permute.xlu0 %701
        %711 = vrot.lane.b32.xlu0 %v643, 8
        %v712 = vpop.permute.xlu0 %711
        %713 = vrot.lane.b32.xlu0 %v644, 8
        %v714 = vpop.permute.xlu0 %713
        %715 = vrot.lane.b32.xlu0 %v645, 8
        %v716 = vpop.permute.xlu0 %715
        %717 = vrot.lane.b32.xlu0 %v646, 8
        %v718 = vpop.permute.xlu0 %717
        %719 = vrot.lane.b32.xlu0 %v647, 8
        %v720 = vpop.permute.xlu0 %719
        %721 = vrot.lane.b32.xlu0 %v648, 8
        %v722 = vpop.permute.xlu0 %721
        %723 = vrot.lane.b32.xlu0 %v649, 8
        %v724 = vpop.permute.xlu0 %723
        %725 = vrot.lane.b32.xlu0 %v650, 8
        %v726 = vpop.permute.xlu0 %725
        %735 = vrot.lane.b32.xlu0 %v609, 12
        %v736 = vpop.permute.xlu0 %735
        %737 = vrot.lane.b32.xlu0 %v610, 12
        %v738 = vpop.permute.xlu0 %737
        %739 = vrot.lane.b32.xlu0 %v611, 12
        %v740 = vpop.permute.xlu0 %739
        %741 = vrot.lane.b32.xlu0 %v612, 12
        %v742 = vpop.permute.xlu0 %741
        %743 = vrot.lane.b32.xlu0 %v613, 12
        %v744 = vpop.permute.xlu0 %743
        %745 = vrot.lane.b32.xlu0 %v614, 12
        %v746 = vpop.permute.xlu0 %745
        %747 = vrot.lane.b32.xlu0 %v615, 12
        %v748 = vpop.permute.xlu0 %747
        %749 = vrot.lane.b32.xlu0 %v664, 12
        %v750 = vpop.permute.xlu0 %749
        %751 = vrot.lane.b32.xlu0 %v534, 16
        %v752 = vpop.permute.xlu0 %751
        %753 = vrot.lane.b32.xlu0 %v535, 16
        %v754 = vpop.permute.xlu0 %753
        %755 = vrot.lane.b32.xlu0 %v536, 16
        %v756 = vpop.permute.xlu0 %755
        %757 = vrot.lane.b32.xlu0 %v537, 16
        %v758 = vpop.permute.xlu0 %757
        %759 = vrot.lane.b32.xlu0 %v538, 16
        %v760 = vpop.permute.xlu0 %759
        %761 = vrot.lane.b32.xlu0 %v539, 16
        %v762 = vpop.permute.xlu0 %761
        %763 = vrot.lane.b32.xlu0 %v540, 16
        %v764 = vpop.permute.xlu0 %763
        %765 = vrot.lane.b32.xlu0 %v655, 16
        %v766 = vpop.permute.xlu0 %765
        %768 = vrot.lane.b32.xlu0 %v644, 20
        %v769 = vpop.permute.xlu0 %768
        %770 = vrot.lane.b32.xlu0 %v645, 20
        %v771 = vpop.permute.xlu0 %770
        %772 = vrot.lane.b32.xlu0 %v646, 20
        %v773 = vpop.permute.xlu0 %772
        %774 = vrot.lane.b32.xlu0 %v647, 20
        %v775 = vpop.permute.xlu0 %774
        %776 = vrot.lane.b32.xlu0 %v648, 20
        %v777 = vpop.permute.xlu0 %776
        %778 = vrot.lane.b32.xlu0 %v649, 20
        %v779 = vpop.permute.xlu0 %778
        %780 = vrot.lane.b32.xlu0 %v650, 20
        %v781 = vpop.permute.xlu0 %780
        %782 = vrot.lane.b32.xlu0 %v668, 20
        %v783 = vpop.permute.xlu0 %782
        %785 = vrot.lane.b32.xlu0 %v610, 24
        %v786 = vpop.permute.xlu0 %785
        %787 = vrot.lane.b32.xlu0 %v611, 24
        %v788 = vpop.permute.xlu0 %787
        %789 = vrot.lane.b32.xlu0 %v612, 24
        %v790 = vpop.permute.xlu0 %789
        %791 = vrot.lane.b32.xlu0 %v613, 24
        %v792 = vpop.permute.xlu0 %791
        %793 = vrot.lane.b32.xlu0 %v614, 24
        %v794 = vpop.permute.xlu0 %793
        %795 = vrot.lane.b32.xlu0 %v615, 24
        %v796 = vpop.permute.xlu0 %795
        %797 = vrot.lane.b32.xlu0 %v664, 24
        %v798 = vpop.permute.xlu0 %797
        %799 = vrot.lane.b32.xlu0 %v682, 24
        %v800 = vpop.permute.xlu0 %799
        %801 = vrot.lane.b32.xlu0 %v535, 28
        %v802 = vpop.permute.xlu0 %801
        %803 = vrot.lane.b32.xlu0 %v536, 28
        %v804 = vpop.permute.xlu0 %803
        %805 = vrot.lane.b32.xlu0 %v537, 28
        %v806 = vpop.permute.xlu0 %805
        %807 = vrot.lane.b32.xlu0 %v538, 28
        %v808 = vpop.permute.xlu0 %807
        %809 = vrot.lane.b32.xlu0 %v539, 28
        %v810 = vpop.permute.xlu0 %809
        %811 = vrot.lane.b32.xlu0 %v540, 28
        %v812 = vpop.permute.xlu0 %811
        %813 = vrot.lane.b32.xlu0 %v655, 28
        %v814 = vpop.permute.xlu0 %813
        %815 = vrot.lane.b32.xlu0 %v673, 28
        %v816 = vpop.permute.xlu0 %815
        %818 = vrot.lane.b32.xlu0 %v645, 32
        %v819 = vpop.permute.xlu0 %818
        %820 = vrot.lane.b32.xlu0 %v646, 32
        %v821 = vpop.permute.xlu0 %820
        %822 = vrot.lane.b32.xlu0 %v647, 32
        %v823 = vpop.permute.xlu0 %822
        %824 = vrot.lane.b32.xlu0 %v648, 32
        %v825 = vpop.permute.xlu0 %824
        %826 = vrot.lane.b32.xlu0 %v649, 32
        %v827 = vpop.permute.xlu0 %826
        %828 = vrot.lane.b32.xlu0 %v650, 32
        %v829 = vpop.permute.xlu0 %828
        %830 = vrot.lane.b32.xlu0 %v668, 32
        %v831 = vpop.permute.xlu0 %830
        %832 = vrot.lane.b32.xlu0 %v686, 32
        %v833 = vpop.permute.xlu0 %832
        %vm834 = vcmask 31744
        %v837 = vsel %vm834, %v608, %v688
        %v840 = vsel %vm834, %v609, %v690
        %v843 = vsel %vm834, %v610, %v692
        %v846 = vsel %vm834, %v611, %v694
        %v849 = vsel %vm834, %v612, %v696
        %v852 = vsel %vm834, %v613, %v698
        %v855 = vsel %vm834, %v614, %v700
        %v858 = vsel %vm834, %v615, %v702
        %vm859 = vcmask 64512
        %v861 = vsel %vm859, %v837, %v712
        %v863 = vsel %vm859, %v840, %v714
        %v865 = vsel %vm859, %v843, %v716
        %v867 = vsel %vm859, %v846, %v718
        %v869 = vsel %vm859, %v849, %v720
        %v871 = vsel %vm859, %v852, %v722
        %v873 = vsel %vm859, %v855, %v724
        %v875 = vsel %vm859, %v858, %v726
        %vm876 = vcmask 97280
        %v878 = vsel %vm876, %v861, %v736
        %v880 = vsel %vm876, %v863, %v738
        %v882 = vsel %vm876, %v865, %v740
        %v884 = vsel %vm876, %v867, %v742
        %v886 = vsel %vm876, %v869, %v744
        %v888 = vsel %vm876, %v871, %v746
        %v890 = vsel %vm876, %v873, %v748
        %v892 = vsel %vm876, %v875, %v750
        %vm893 = vcmask 130048
        %v895 = vsel %vm893, %v878, %v752
        %v897 = vsel %vm893, %v880, %v754
        %v899 = vsel %vm893, %v882, %v756
        %v901 = vsel %vm893, %v884, %v758
        %v903 = vsel %vm893, %v886, %v760
        %v905 = vsel %vm893, %v888, %v762
        %v907 = vsel %vm893, %v890, %v764
        %v909 = vsel %vm893, %v892, %v766
        %vm910 = vcmask 162816
        %v912 = vsel %vm910, %v895, %v769
        %v914 = vsel %vm910, %v897, %v771
        %v916 = vsel %vm910, %v899, %v773
        %v918 = vsel %vm910, %v901, %v775
        %v920 = vsel %vm910, %v903, %v777
        %v922 = vsel %vm910, %v905, %v779
        %v924 = vsel %vm910, %v907, %v781
        %v926 = vsel %vm910, %v909, %v783
        %vm927 = vcmask 195584
        %v929 = vsel %vm927, %v912, %v786
        %v931 = vsel %vm927, %v914, %v788
        %v933 = vsel %vm927, %v916, %v790
        %v935 = vsel %vm927, %v918, %v792
        %v937 = vsel %vm927, %v920, %v794
        %v939 = vsel %vm927, %v922, %v796
        %v941 = vsel %vm927, %v924, %v798
        %v943 = vsel %vm927, %v926, %v800
        %vm944 = vcmask 228352
        %v946 = vsel %vm944, %v929, %v802
        %v948 = vsel %vm944, %v931, %v804
        %v950 = vsel %vm944, %v933, %v806
        %v952 = vsel %vm944, %v935, %v808
        %v954 = vsel %vm944, %v937, %v810
        %v956 = vsel %vm944, %v939, %v812
        %v958 = vsel %vm944, %v941, %v814
        %v960 = vsel %vm944, %v943, %v816
        %vm961 = vcmask 261120
        %v963 = vsel %vm961, %v946, %v819
        %v965 = vsel %vm961, %v948, %v821
        %v967 = vsel %vm961, %v950, %v823
        %v969 = vsel %vm961, %v952, %v825
        %v971 = vsel %vm961, %v954, %v827
        %v973 = vsel %vm961, %v956, %v829
        %v975 = vsel %vm961, %v958, %v831
        %v977 = vsel %vm961, %v960, %v833
        %v978 = vld [vmem:[%s3] sm:$0xf]
        %v979 = vld [vmem:[%s3 + $0x4] sm:$0xf]
        %v980 = vld [vmem:[%s3 + $0x8] sm:$0xf]
        %v981 = vld [vmem:[%s3 + $0xc] sm:$0xf]
        %v982 = vld [vmem:[%s3 + $0x10] sm:$0x3]
        %v983 = vld [vmem:[%s4] sm:$0x1]
        %v985 = vlaneseq
        %v986 = vshrl.u32 %v985, 7
        %v987 = vsub.s32 0, %v986
        %v988 = vrot.slane %v983, %v987
        %v995 = vunpack.c.l.b16 %v978
        %v996 = vunpack.c.l.b16 %v979
        %v997 = vunpack.c.l.b16 %v980
        %v998 = vunpack.c.l.b16 %v981
        %v999 = vunpack.c.l.b16 %v982
        %v1000 = vpack.c.b16 %v996, %v995
        %v1001 = vpack.c.b16 %v998, %v997
        %v1002 = vpack.c.b16 %v999, %v999
        %vm1005 = vcmask 293888
        %v1006 = vsel %vm1005, %v963, 0
        %v1008 = vsel %vm1005, %v965, 0
        %v1010 = vsel %vm1005, %v967, 0
        %v1012 = vsel %vm1005, %v969, 0
        %v1014 = vsel %vm1005, %v971, 0
        %v1016 = vsel %vm1005, %v973, 0
        %v1018 = vsel %vm1005, %v975, 0
        %v1020 = vsel %vm1005, %v977, 0
        %vm1022 = vcmask 1041408
        %v1024 = vsel %vm1022, %v1002, 0
        %1026 = vmatprep.subr.bf16.mxu0 0
        %1027 = vmatpush1.bf16.msra.mxu0 %v1000
        %1028 = vmatprep.subr.bf16.mxu0 0
        %1029 = vmatpush1.bf16.msra.mxu0 %v1001
        %1030 = vmatprep.subr.bf16.mxu0 0
        %1031 = vmatpush1.bf16.msra.mxu0 %v1024
        %1032 = vmatprep.subr.bf16.mxu0 0
        %1033 = vmatpush1.bf16.msra.mxu0 0
        %1034 = vmatprep.subr.bf16.mxu0 0
        %1035 = vmatpush1.bf16.msra.mxu0 0
        %1036 = vmatprep.subr.bf16.mxu0 0
        %1037 = vmatpush1.bf16.msra.mxu0 0
        %1038 = vmatprep.subr.bf16.mxu0 0
        %1039 = vmatpush1.bf16.msra.mxu0 0
        %1040 = vmatprep.subr.bf16.mxu0 0
        %1041 = vmatpush1.bf16.msra.mxu0 0
        %1042 = vmatprep.subr.bf16.mxu0 0
        %1043 = vmatpush1.bf16.msra.mxu0 0
        %1044 = vmatprep.subr.bf16.mxu0 0
        %1045 = vmatpush1.bf16.msra.mxu0 0
        %1046 = vmatprep.subr.bf16.mxu0 0
        %1047 = vmatpush1.bf16.msra.mxu0 0
        %1048 = vmatprep.subr.bf16.mxu0 0
        %1049 = vmatpush1.bf16.msra.mxu0 0
        %1050 = vmatprep.subr.bf16.mxu0 0
        %1051 = vmatpush1.bf16.msra.mxu0 0
        %1052 = vmatprep.subr.bf16.mxu0 0
        %1053 = vmatpush1.bf16.msra.mxu0 0
        %1054 = vmatprep.subr.bf16.mxu0 0
        %1055 = vmatpush1.bf16.msra.mxu0 0
        %1056 = vmatprep.subr.bf16.mxu0 0
        %1057 = vmatpush1.bf16.msra.mxu0 0
        %1058 = vmatprep.mubr.bf16.mxu0 0
        %1059 = vmatmul.mubr.bf16.gmra.mrb[0].mxu0 %v1006
        %v1060 = vpop.f32.mrb[0].mxu0
        %v1061 = vadd.f32 %v988, %v1060
        %v1062 = vpop.f32.mrb[0].mxu0
        %v1063 = vpop.f32.mrb[0].mxu0
        %v1064 = vadd.f32 %v988, %v1063
        %v1065 = vpop.f32.mrb[0].mxu0
        %1066 = vmatprep.mubr.bf16.mxu0 0
        %1067 = vmatmul.mubr.bf16.gmra.mrb[0].mxu0 %v1008
        %v1068 = vpop.f32.mrb[0].mxu0
        %v1069 = vadd.f32 %v988, %v1068
        %v1070 = vpop.f32.mrb[0].mxu0
        %v1071 = vpop.f32.mrb[0].mxu0
        %v1072 = vadd.f32 %v988, %v1071
        %v1073 = vpop.f32.mrb[0].mxu0
        %1074 = vmatprep.mubr.bf16.mxu0 0
        %1075 = vmatmul.mubr.bf16.gmra.mrb[0].mxu0 %v1010
        %v1076 = vpop.f32.mrb[0].mxu0
        %v1077 = vadd.f32 %v988, %v1076
        %v1078 = vpop.f32.mrb[0].mxu0
        %v1079 = vpop.f32.mrb[0].mxu0
        %v1080 = vadd.f32 %v988, %v1079
        %v1081 = vpop.f32.mrb[0].mxu0
        %1082 = vmatprep.mubr.bf16.mxu0 0
        %1083 = vmatmul.mubr.bf16.gmra.mrb[0].mxu0 %v1012
        %v1084 = vpop.f32.mrb[0].mxu0
        %v1085 = vadd.f32 %v988, %v1084
        %v1086 = vpop.f32.mrb[0].mxu0
        %v1087 = vpop.f32.mrb[0].mxu0
        %v1088 = vadd.f32 %v988, %v1087
        %v1089 = vpop.f32.mrb[0].mxu0
        %1090 = vmatprep.mubr.bf16.mxu0 0
        %1091 = vmatmul.mubr.bf16.gmra.mrb[0].mxu0 %v1014
        %v1092 = vpop.f32.mrb[0].mxu0
        %v1093 = vadd.f32 %v988, %v1092
        %v1094 = vpop.f32.mrb[0].mxu0
        %v1095 = vpop.f32.mrb[0].mxu0
        %v1096 = vadd.f32 %v988, %v1095
        %v1097 = vpop.f32.mrb[0].mxu0
        %1098 = vmatprep.mubr.bf16.mxu0 0
        %1099 = vmatmul.mubr.bf16.gmra.mrb[0].mxu0 %v1016
        %v1100 = vpop.f32.mrb[0].mxu0
        %v1101 = vadd.f32 %v988, %v1100
        %v1102 = vpop.f32.mrb[0].mxu0
        %v1103 = vpop.f32.mrb[0].mxu0
        %v1104 = vadd.f32 %v988, %v1103
        %v1105 = vpop.f32.mrb[0].mxu0
        %1106 = vmatprep.mubr.bf16.mxu0 0
        %1107 = vmatmul.mubr.bf16.gmra.mrb[0].mxu0 %v1018
        %v1108 = vpop.f32.mrb[0].mxu0
        %v1109 = vadd.f32 %v988, %v1108
        %v1110 = vpop.f32.mrb[0].mxu0
        %v1111 = vpop.f32.mrb[0].mxu0
        %v1112 = vadd.f32 %v988, %v1111
        %v1113 = vpop.f32.mrb[0].mxu0
        %1114 = vmatprep.mubr.bf16.mxu0 0
        %1115 = vmatmul.mubr.bf16.gmra.mrb[0].mxu0 %v1020
        %v1116 = vpop.f32.mrb[0].mxu0
        %v1117 = vadd.f32 %v988, %v1116
        %v1118 = vpop.f32.mrb[0].mxu0
        %v1119 = vpop.f32.mrb[0].mxu0
        %v1120 = vadd.f32 %v988, %v1119
        %v1121 = vpop.f32.mrb[0].mxu0
        %1122 = vdwg.mxu0
        %v1123 = vsel %vm859, %v1061, 0.0
        %v1124 = vsel %vm859, %v1064, 0.0
        %v1125 = vadd.f32 %v1123, %v1124
        %v1126 = vsel %vm859, %v1069, 0.0
        %v1127 = vadd.f32 %v1125, %v1126
        %v1128 = vsel %vm859, %v1072, 0.0
        %v1129 = vadd.f32 %v1127, %v1128
        %v1130 = vsel %vm859, %v1077, 0.0
        %v1131 = vadd.f32 %v1129, %v1130
        %v1132 = vsel %vm859, %v1080, 0.0
        %v1133 = vadd.f32 %v1131, %v1132
        %v1134 = vsel %vm859, %v1085, 0.0
        %v1135 = vadd.f32 %v1133, %v1134
        %v1136 = vsel %vm859, %v1088, 0.0
        %v1137 = vadd.f32 %v1135, %v1136
        %v1138 = vsel %vm859, %v1093, 0.0
        %v1139 = vadd.f32 %v1137, %v1138
        %v1140 = vsel %vm859, %v1096, 0.0
        %v1141 = vadd.f32 %v1139, %v1140
        %v1142 = vsel %vm859, %v1101, 0.0
        %v1143 = vadd.f32 %v1141, %v1142
        %v1144 = vsel %vm859, %v1104, 0.0
        %v1145 = vadd.f32 %v1143, %v1144
        %v1146 = vsel %vm859, %v1109, 0.0
        %v1147 = vadd.f32 %v1145, %v1146
        %v1148 = vsel %vm859, %v1112, 0.0
        %v1149 = vadd.f32 %v1147, %v1148
        %v1150 = vsel %vm859, %v1117, 0.0
        %v1151 = vadd.f32 %v1149, %v1150
        %v1152 = vsel %vm859, %v1120, 0.0
        %v1153 = vadd.f32 %v1151, %v1152
        %v1154 = vrot.slane %v1153, 4
        %v1155 = vadd.f32 %v1153, %v1154
        %v1156 = vrot.slane %v1155, 2
        %v1157 = vadd.f32 %v1155, %v1156
        %v1158 = vrot.slane %v1157, 1
        %v1159 = vadd.f32 %v1157, %v1158
        %vm1160 = vcmask 57344
        %1161 = vst.msk [vmem:[%s406] sm:$0x1] %vm1160, %v1159
        %v1162 = vmul.f32 %v1061, %v1061
        %v1163 = vmul.f32 %v1064, %v1064
        %v1164 = vmul.f32 %v1069, %v1069
        %v1165 = vmul.f32 %v1072, %v1072
        %v1166 = vmul.f32 %v1077, %v1077
        %v1167 = vmul.f32 %v1080, %v1080
        %v1168 = vmul.f32 %v1085, %v1085
        %v1169 = vmul.f32 %v1088, %v1088
        %v1170 = vmul.f32 %v1093, %v1093
        %v1171 = vmul.f32 %v1096, %v1096
        %v1172 = vmul.f32 %v1101, %v1101
        %v1173 = vmul.f32 %v1104, %v1104
        %v1174 = vmul.f32 %v1109, %v1109
        %v1175 = vmul.f32 %v1112, %v1112
        %v1176 = vmul.f32 %v1117, %v1117
        %v1177 = vmul.f32 %v1120, %v1120
        %v1178 = vsel %vm859, %v1162, 0.0
        %v1179 = vsel %vm859, %v1163, 0.0
        %v1180 = vadd.f32 %v1178, %v1179
        %v1181 = vsel %vm859, %v1164, 0.0
        %v1182 = vadd.f32 %v1180, %v1181
        %v1183 = vsel %vm859, %v1165, 0.0
        %v1184 = vadd.f32 %v1182, %v1183
        %v1185 = vsel %vm859, %v1166, 0.0
        %v1186 = vadd.f32 %v1184, %v1185
        %v1187 = vsel %vm859, %v1167, 0.0
        %v1188 = vadd.f32 %v1186, %v1187
        %v1189 = vsel %vm859, %v1168, 0.0
        %v1190 = vadd.f32 %v1188, %v1189
        %v1191 = vsel %vm859, %v1169, 0.0
        %v1192 = vadd.f32 %v1190, %v1191
        %v1193 = vsel %vm859, %v1170, 0.0
        %v1194 = vadd.f32 %v1192, %v1193
        %v1195 = vsel %vm859, %v1171, 0.0
        %v1196 = vadd.f32 %v1194, %v1195
        %v1197 = vsel %vm859, %v1172, 0.0
        %v1198 = vadd.f32 %v1196, %v1197
        %v1199 = vsel %vm859, %v1173, 0.0
        %v1200 = vadd.f32 %v1198, %v1199
        %v1201 = vsel %vm859, %v1174, 0.0
        %v1202 = vadd.f32 %v1200, %v1201
        %v1203 = vsel %vm859, %v1175, 0.0
        %v1204 = vadd.f32 %v1202, %v1203
        %v1205 = vsel %vm859, %v1176, 0.0
        %v1206 = vadd.f32 %v1204, %v1205
        %v1207 = vsel %vm859, %v1177, 0.0
        %v1208 = vadd.f32 %v1206, %v1207
        %v1209 = vrot.slane %v1208, 4
        %v1210 = vadd.f32 %v1208, %v1209
        %v1211 = vrot.slane %v1210, 2
        %v1212 = vadd.f32 %v1210, %v1211
        %v1213 = vrot.slane %v1212, 1
        %v1214 = vadd.f32 %v1212, %v1213
        %1215 = vst.msk [vmem:[%s412] sm:$0x1] %vm1160, %v1214
        %v1216 = vpack.c.bf16 %v1064, %v1061
        %v1217 = vpack.c.bf16 %v1072, %v1069
        %v1218 = vpack.c.bf16 %v1080, %v1077
        %v1219 = vpack.c.bf16 %v1088, %v1085
        %v1220 = vpack.c.bf16 %v1096, %v1093
        %v1221 = vpack.c.bf16 %v1104, %v1101
        %v1222 = vpack.c.bf16 %v1112, %v1109
        %v1223 = vpack.c.bf16 %v1120, %v1117
        %v1232 = vunpack.c.l.b16 %v1216
        %v1233 = vunpack.c.h.b16 %v1216
        %v1234 = vunpack.c.l.b16 %v1217
        %v1235 = vunpack.c.h.b16 %v1217
        %v1236 = vunpack.c.l.b16 %v1218
        %v1237 = vunpack.c.h.b16 %v1218
        %v1238 = vunpack.c.l.b16 %v1219
        %v1239 = vunpack.c.h.b16 %v1219
        %v1240 = vunpack.c.l.b16 %v1220
        %v1241 = vunpack.c.h.b16 %v1220
        %v1242 = vunpack.c.l.b16 %v1221
        %v1243 = vunpack.c.h.b16 %v1221
        %v1244 = vunpack.c.l.b16 %v1222
        %v1245 = vunpack.c.h.b16 %v1222
        %v1246 = vunpack.c.l.b16 %v1223
        %v1247 = vunpack.c.h.b16 %v1223
        %v1248 = vpack.c.b16 %v1232, %v1232
        %v1249 = vpack.c.b16 %v1233, %v1233
        %v1250 = vpack.c.b16 %v1234, %v1234
        %v1251 = vpack.c.b16 %v1235, %v1235
        %v1252 = vpack.c.b16 %v1236, %v1236
        %v1253 = vpack.c.b16 %v1237, %v1237
        %v1254 = vpack.c.b16 %v1238, %v1238
        %v1255 = vpack.c.b16 %v1239, %v1239
        %v1256 = vpack.c.b16 %v1240, %v1240
        %v1257 = vpack.c.b16 %v1241, %v1241
        %v1258 = vpack.c.b16 %v1242, %v1242
        %v1259 = vpack.c.b16 %v1243, %v1243
        %v1260 = vpack.c.b16 %v1244, %v1244
        %v1261 = vpack.c.b16 %v1245, %v1245
        %v1262 = vpack.c.b16 %v1246, %v1246
        %v1263 = vpack.c.b16 %v1247, %v1247
        %vm1280 = vcmask 60416
        %1281 = vst.msk [vmem:[%s466] sm:$0xf] %vm1280, %v1248
        %1282 = vst.msk [vmem:[%s466 + $0x4] sm:$0xf] %vm1280, %v1249
        %1283 = vst.msk [vmem:[%s466 + $0x8] sm:$0xf] %vm1280, %v1250
        %1284 = vst.msk [vmem:[%s466 + $0xc] sm:$0xf] %vm1280, %v1251
        %1285 = vst.msk [vmem:[%s466 + $0x10] sm:$0xf] %vm1280, %v1252
        %1286 = vst.msk [vmem:[%s466 + $0x14] sm:$0xf] %vm1280, %v1253
        %1287 = vst.msk [vmem:[%s466 + $0x18] sm:$0xf] %vm1280, %v1254
        %1288 = vst.msk [vmem:[%s466 + $0x1c] sm:$0xf] %vm1280, %v1255
        %1289 = vst.msk [vmem:[%s466 + $0x20] sm:$0xf] %vm1280, %v1256
        %1290 = vst.msk [vmem:[%s466 + $0x24] sm:$0xf] %vm1280, %v1257
        %1291 = vst.msk [vmem:[%s466 + $0x28] sm:$0xf] %vm1280, %v1258
        %1292 = vst.msk [vmem:[%s466 + $0x2c] sm:$0xf] %vm1280, %v1259
        %1293 = vst.msk [vmem:[%s466 + $0x30] sm:$0xf] %vm1280, %v1260
        %1294 = vst.msk [vmem:[%s466 + $0x34] sm:$0xf] %vm1280, %v1261
        %1295 = vst.msk [vmem:[%s466 + $0x38] sm:$0xf] %vm1280, %v1262
        %1296 = vst.msk [vmem:[%s466 + $0x3c] sm:$0xf] %vm1280, %v1263
        %s1297 = smul.u32 16, %s30
        %p1298 = scmp.lt.s32.totalorder %s29, 1
        %s1299 = scalar_select %p1298, %s29, 1
        %p1300 = scmp.lt.s32.totalorder %s1297, 31
        %s1301 = scalar_select %p1300, %s1297, 31
        %s1302 = smul.addr %s1299, 32
        %s1303 = sadd.s32 %s1301, %s1302
        %s1304 = smul.addr %s1303, 4
        %s1305 = scalar_lea.vmem %s5, %s1304
        %s1306 = sand.u32 %s217, 1
        %s1307 = scalar_lea.sflag [#allocation3], %s1306
        %s1308 = sand.u32 %s217, 1
        %s1309 = scalar_lea.vmem [#allocation2], %s1308
        %s1310 = sand.u32 %s245, 1
        %s1311 = scalar_lea.sflag [#allocation5], %s1310
        %s1312 = sand.u32 %s245, 1
        %s1313 = scalar_lea.vmem [#allocation4], %s1312
        // Predicated region
        $region41: #{tpu_custom_call.1} parent=39 // pred_check
          %p1314 = pneg %p199
        $region42: #{tpu_custom_call.1} parent=39 // pred_check_branch
          %1316 = sbr.rel (%p1314) target = $region44
        $region43: #{tpu_custom_call.1} parent=39 // pred_region
          %s1317 = smul.u32 16, %s30
        $region44: #{tpu_custom_call.1} parent=39 // pred_fallthru
          _
        // Predicated region
        $region45: #{tpu_custom_call.1} parent=39 // pred_check
          %p1318 = pneg %p227
        $region46: #{tpu_custom_call.1} parent=39 // pred_check_branch
          %1320 = sbr.rel (%p1318) target = $region48
        $region47: #{tpu_custom_call.1} parent=39 // pred_region
          %s1322 = ssub.s32 16, 16
          %1323 = vsyncadd %s1307, %s1322
          %s1324 = smul.addr %s29, 2
          %s1325 = sadd.s32 %s30, %s1324
          %s1326 = smul.addr %s1325, 16
          %s1327 = scalar_lea.hbm %s6, %s1326
          %s1329 = sshll.u32 %s1309, 4
          %s1330 = int_to_ptr.vmem [resolvable:$true] %s1329
          %1332 = dma.vmem_to_hbm [thread:$0]  %s1330, 16, %s1327, %s1307
        $region48: #{tpu_custom_call.1} parent=39 // pred_fallthru
          _
        // Predicated region
        $region49: #{tpu_custom_call.1} parent=39 // pred_check
          %p1333 = pneg %p255
        $region50: #{tpu_custom_call.1} parent=39 // pred_check_branch
          %1335 = sbr.rel (%p1333) target = $region52
        $region51: #{tpu_custom_call.1} parent=39 // pred_region
          %s1337 = ssub.s32 16, 16
          %1338 = vsyncadd %s1311, %s1337
          %s1339 = smul.addr %s29, 2
          %s1340 = sadd.s32 %s30, %s1339
          %s1341 = smul.addr %s1340, 16
          %s1342 = scalar_lea.hbm %s7, %s1341
          %s1344 = sshll.u32 %s1313, 4
          %s1345 = int_to_ptr.vmem [resolvable:$true] %s1344
          %1347 = dma.vmem_to_hbm [thread:$0]  %s1345, 16, %s1342, %s1311
        $region52: #{tpu_custom_call.1} parent=39 // pred_fallthru
          _
      $region40: #{tpu_custom_call.1} parent=5 // pred_fallthru
        _
      %p1348 = scmp.le.s32.totalorder 2, %s20
      // Predicated region
      $region53: #{tpu_custom_call.1} parent=5 // pred_check
        %p1349 = pneg %p1348
      $region54: #{tpu_custom_call.1} parent=5 // pred_check_branch
        %1351 = sbr.rel (%p1349) target = $region56
      $region55: #{tpu_custom_call.1} parent=5 // pred_region
        %s1352 = ssub.s32 %s20, 2
        // Predicated region
        $region57: #{tpu_custom_call.1} parent=55 // pred_check
          %p1353 = pneg %p205
        $region58: #{tpu_custom_call.1} parent=55 // pred_check_branch
          %1355 = sbr.rel (%p1353) target = $region60
        $region59: #{tpu_custom_call.1} parent=55 // pred_region
          %s1356 = smul.u32 16, %s32
          %p1357 = scmp.lt.s32.totalorder %s31, 1
          %s1358 = scalar_select %p1357, %s31, 1
          %p1359 = scmp.lt.s32.totalorder %s1356, 31
          %s1360 = scalar_select %p1359, %s1356, 31
          %s1361 = smul.addr %s1358, 32
          %s1362 = sadd.s32 %s1360, %s1361
          %s1363 = smul.addr %s1362, 4
          %s1364 = scalar_lea.vmem %s5, %s1363
        $region60: #{tpu_custom_call.1} parent=55 // pred_fallthru
          _
        // Predicated region
        $region61: #{tpu_custom_call.1} parent=55 // pred_check
          %p1365 = pneg %p233
        $region62: #{tpu_custom_call.1} parent=55 // pred_check_branch
          %1367 = sbr.rel (%p1365) target = $region64
        $region63: #{tpu_custom_call.1} parent=55 // pred_region
          %s1368 = sand.u32 %s218, 1
          %s1369 = scalar_lea.sflag [#allocation3], %s1368
          %s1370 = sand.u32 %s218, 1
          %s1371 = scalar_lea.vmem [#allocation2], %s1370
          %1372 = dma.done %s1369, 16
        $region64: #{tpu_custom_call.1} parent=55 // pred_fallthru
          _
        // Predicated region
        $region65: #{tpu_custom_call.1} parent=55 // pred_check
          %p1373 = pneg %p261
        $region66: #{tpu_custom_call.1} parent=55 // pred_check_branch
          %1375 = sbr.rel (%p1373) target = $region68
        $region67: #{tpu_custom_call.1} parent=55 // pred_region
          %s1376 = sand.u32 %s246, 1
          %s1377 = scalar_lea.sflag [#allocation5], %s1376
          %s1378 = sand.u32 %s246, 1
          %s1379 = scalar_lea.vmem [#allocation4], %s1378
          %1380 = dma.done %s1377, 16
        $region68: #{tpu_custom_call.1} parent=55 // pred_fallthru
          _
      $region56: #{tpu_custom_call.1} parent=5 // pred_fallthru
        _
    $region6: #{tpu_custom_call.1} parent=1 // loop_footer
      %s24 = sadd.s32 1, %s20
    $region7: #{tpu_custom_call.1} parent=1 // loop_footer_branch
      %19 = sbr.rel target = $region3
    $region8: #{tpu_custom_call.1} parent=1 // loop_exit
      _
    %1381 = vsyncpa [#allocation3], 1
    %s1382 = scalar_lea.sflag [#allocation3], 1
    %1383 = vsyncpa %s1382, 1
    %1384 = vsyncpa [#allocation5], 1
    %s1385 = scalar_lea.sflag [#allocation5], 1
    %1386 = vsyncpa %s1385, 1

</llo_original>
